<compile_context>
chip_gen: v6e
topology: v6e:2x2x1
jax: 0.10.0
libtpu: 0.0.40
codegen_flags: <defaults>
</compile_context>

<pallas_src>
import functools
import numpy as np
import jax
import jax.numpy as jnp
from jax.experimental import pallas as pl
from jax.experimental.pallas import tpu as pltpu

_INV_SQRT2 = 0.7071067811865476

# vec-slab column layout (see pack_params)
_VEC_BN0S, _VEC_BN0B, _VEC_BN1B, _VEC_BN2B, _VEC_BE, _VEC_BPROJ = 9, 10, 11, 12, 13, 14
_VEC_WIDTH = 16   # cols 0..8 hold the 3x3 depthwise taps (BN1-scaled)


def _mod(v, m):
    """v % m with m a static Python int (AND when m is a power of two)."""
    if m & (m - 1) == 0:
        return v & (m - 1)
    return v % m


def _erf_approx(x):
    # XLA/Eigen single-precision rational erf approximation.  The final divide
    # is replaced by an EUP reciprocal (own VLIW slot) to shorten the VALU path.
    x = jnp.clip(x, -4.0, 4.0)
    x2 = x * x
    p = x2 * (-2.72614225801306e-10) + 2.77068142495902e-08
    p = x2 * p + (-2.10102402082508e-06)
    p = x2 * p + (-5.69250639462346e-05)
    p = x2 * p + (-7.34990630326855e-04)
    p = x2 * p + (-2.95459980854025e-03)
    p = x2 * p + (-1.60960333262415e-02)
    p = x * p
    q = x2 * (-1.45660718464996e-05) + (-2.13374055278905e-04)
    q = x2 * q + (-1.68282697438203e-03)
    q = x2 * q + (-7.37332916720468e-03)
    q = x2 * q + (-1.42647390514189e-02)
    return p * pl.reciprocal(q, approx=True)


def _gelu_exact(x):
    # torch.nn.functional.gelu default (erf-based)
    return 0.5 * x * (1.0 + _erf_approx(x * _INV_SQRT2))


def _mbconv_kernel(x_ref, vec_ref, wpw_ref, wproj_ref, sew_ref, br_ref, o_ref,
                   *, height, width, imgs, rd):
    H, W = height, width
    HW = H * W
    L = imgs * HW                       # lane extent of the fattened step

    vec = vec_ref[...]                  # (C, 16) packed per-channel params
    bn0s = vec[:, _VEC_BN0S:_VEC_BN0S + 1]
    bn0b = vec[:, _VEC_BN0B:_VEC_BN0B + 1]
    bn1b = vec[:, _VEC_BN1B:_VEC_BN1B + 1]
    bn2b = vec[:, _VEC_BN2B:_VEC_BN2B + 1]
    be = vec[:, _VEC_BE:_VEC_BE + 1]
    bproj = vec[:, _VEC_BPROJ:_VEC_BPROJ + 1]

    def read_x():
        # (C, imgs*HW): cheap VMEM lane concat of the per-image tiles
        if imgs == 1:
            return x_ref[0]
        return jnp.concatenate([x_ref[i] for i in range(imgs)], axis=-1)

    # ---- pre-norm BN0 (eval): per-channel scale/shift broadcast over lanes ----
    y0 = read_x() * bn0s + bn0b                           # (C, L)

    # ---- 3x3 depthwise conv (stride 1, pad 1), BN1 scale folded into taps ----
    # Shifts = cyclic lane rolls over the flattened (per-image) H*W axis; zero
    # padding comes from masking the positions that would wrap BEFORE rolling,
    # per image (masks built from lane % W and lane % HW), so nothing leaks
    # across row, image, or array boundaries.
    lane = jax.lax.broadcasted_iota(jnp.int32, (1, L), 1)
    col = _mod(lane, W)
    pos = _mod(lane, HW)
    not_last_col = col != (W - 1)
    not_first_col = col != 0
    not_last_row = pos < (H - 1) * W
    not_first_row = pos >= W

    y_left = pltpu.roll(jnp.where(not_last_col, y0, 0.0), shift=1, axis=1)      # y0[h, w-1]
    y_right = pltpu.roll(jnp.where(not_first_col, y0, 0.0), shift=L - 1, axis=1)  # y0[h, w+1]

    def row_tap(kh):                    # sum over kw for one kernel row
        return (y_left * vec[:, 3 * kh + 0:3 * kh + 1]
                + y0 * vec[:, 3 * kh + 1:3 * kh + 2]
                + y_right * vec[:, 3 * kh + 2:3 * kh + 3])

    acc = row_tap(1)                                                             # kh = 1 (no row shift)
    acc = acc + pltpu.roll(jnp.where(not_last_row, row_tap(0), 0.0),
                           shift=W, axis=1)                                      # from row h-1
    acc = acc + pltpu.roll(jnp.where(not_first_row, row_tap(2), 0.0),
                           shift=L - W, axis=1)                                  # from row h+1

    # ---- BN1 bias + exact (erf) GELU ----  (y0/y_left/y_right dead after acc)
    y2 = _gelu_exact(acc + bn1b)

    # ---- pointwise 1x1 conv (BN2 scale folded into rows) + BN2 bias ----
    y4 = jnp.dot(wpw_ref[...], y2, preferred_element_type=jnp.float32) + bn2b

    # ---- internal residual of DepthwiseSeparableConv (recompute y0 from VMEM) ----
    y5 = y4 + (read_x() * bn0s + bn0b)

    # ---- Squeeze-Excitation, per image; VPU mul + XLU reduce, no MXU matvecs ----
    sew = sew_ref[...]                  # (C, 2*rd): [wr^T | we]
    wrT = sew[:, :rd]
    we = sew[:, rd:2 * rd]
    br = br_ref[...]                    # (1, rd)
    gated = []
    for i in range(imgs):
        y5_i = y5[:, i * HW:(i + 1) * HW]
        s = jnp.mean(y5_i, axis=1, keepdims=True)                     # (C, 1) global avg
        r = jnp.sum(wrT * s, axis=0, keepdims=True) + br              # (1, rd)  == (Wr @ s).T + br
        r = jnp.maximum(r, 0.0)
        e = jnp.sum(we * r, axis=1, keepdims=True) + be               # (C, 1)   == We @ r + be
        gated.append(y5_i * jax.nn.sigmoid(e))
    y6 = gated[0] if imgs == 1 else jnp.concatenate(gated, axis=-1)   # (C, L)

    # ---- shrink 1x1 projection (with bias) ----
    y7 = jnp.dot(wproj_ref[...], y6, preferred_element_type=jnp.float32) + bproj

    # ---- outer residual (skip = Identity); re-read x per image at store time ----
    for i in range(imgs):
        o_ref[i] = (y7[:, i * HW:(i + 1) * HW] + x_ref[i]).astype(o_ref.dtype)


def _num_tensorcores():
    try:
        kind = jax.devices()[0].device_kind.lower()
    except Exception:
        return 1
    # megacore chips get an even, parallel grid so both TensorCores have work
    return 2 if any(tag in kind for tag in ("v4", "v5p", "v7")) else 1


def _pick_num_steps(batch, channels, hw):
    ncores = _num_tensorcores()
    per_img_bytes = channels * hw * 4
    max_imgs = max(1, (4 << 20) // per_img_bytes)     # keep each x block <= ~4 MiB
    for steps in range(1, batch + 1):
        if batch % steps:
            continue
        if steps % ncores and steps != batch:
            continue
        if batch // steps <= max_imgs:
            return steps
    return batch


def mbconv_forward(x_nchw, kp, *, downscale=False, num_steps=None):
    if downscale:
        # TODO(synk): downscale=True path (stride-2 depthwise conv + MaxPool2d/1x1 skip) not implemented.
        raise NotImplementedError("downscale path not implemented")
    B, C, H, W = x_nchw.shape
    HW = H * W
    rd = kp["br"].shape[1]
    if num_steps is None:
        num_steps = _pick_num_steps(B, C, HW)
    assert B % num_steps == 0
    imgs = B // num_steps
    x = x_nchw.reshape(B, C, HW)                      # channel-major; free reshape of NCHW

    def const_spec(shape):
        n = len(shape)
        return pl.BlockSpec(shape, lambda s, _n=n: (0,) * _n)

    kernel = functools.partial(_mbconv_kernel, height=H, width=W, imgs=imgs, rd=rd)
    out = pl.pallas_call(
        kernel,
        out_shape=jax.ShapeDtypeStruct((B, C, HW), x.dtype),
        grid=(num_steps,),
        in_specs=[
            pl.BlockSpec((imgs, C, HW), lambda s: (s, 0, 0)),   # x: imgs images / step
            const_spec((C, _VEC_WIDTH)),   # packed per-channel vectors + dw taps
            const_spec((C, C)),            # pointwise weight (BN2-scaled rows)
            const_spec((C, C)),            # projection weight
            const_spec((C, 2 * rd)),       # SE weights [wr^T | we]
            const_spec((1, rd)),           # SE reduce bias (row)
        ],
        out_specs=pl.BlockSpec((imgs, C, HW), lambda s: (s, 0, 0)),
        compiler_params=pltpu.CompilerParams(
            dimension_semantics=("parallel",),
            vmem_limit_bytes=32 * 1024 * 1024),
    )(x, kp["vec"], kp["wpw"], kp["wproj"], kp["sew"], kp["br"])
    return out.reshape(B, C, H, W)


# ---------------------------------------------------------------------------
# Parameter construction (torch layouts) + host-side folding/packing
# ---------------------------------------------------------------------------
def init_torch_params(key, in_channels, rd_ratio=0.25):
    C = in_channels
    rd = int(round(C * rd_ratio))
    ks = iter(jax.random.split(key, 32))

    def bn(n):
        return dict(
            gamma=jax.random.uniform(next(ks), (n,), jnp.float32, 0.8, 1.2),
            beta=0.1 * jax.random.normal(next(ks), (n,), jnp.float32),
            mean=0.1 * jax.random.normal(next(ks), (n,), jnp.float32),
            var=jax.random.uniform(next(ks), (n,), jnp.float32, 0.5, 1.5))

    return dict(
        bn0=bn(C), bn1=bn(C), bn2=bn(C),
        w_dw=0.2 * jax.random.normal(next(ks), (C, 1, 3, 3), jnp.float32),   # Conv2d(C,C,3,groups=C)
        w_pw=0.2 * jax.random.normal(next(ks), (C, C, 1, 1), jnp.float32),   # Conv2d(C,C,1,bias=False)
        w_r=0.2 * jax.random.normal(next(ks), (rd, C, 1, 1), jnp.float32),   # SE reduce
        b_r=0.1 * jax.random.normal(next(ks), (rd,), jnp.float32),
        w_e=0.2 * jax.random.normal(next(ks), (C, rd, 1, 1), jnp.float32),   # SE expand
        b_e=0.1 * jax.random.normal(next(ks), (C,), jnp.float32),
        w_p=0.2 * jax.random.normal(next(ks), (C, C, 1, 1), jnp.float32),    # projection
        b_p=0.1 * jax.random.normal(next(ks), (C,), jnp.float32),
    )


def pack_params(tp, eps=1e-5):
    """Fold eval-mode BN into scale/shift, fold BN1/BN2 scales into conv weights,
    and pack everything into a handful of lane-friendly slabs."""
    def fold(b):
        s = b["gamma"] * jax.lax.rsqrt(b["var"] + eps)
        return s, b["beta"] - b["mean"] * s

    s0, b0 = fold(tp["bn0"])
    s1, b1 = fold(tp["bn1"])
    s2, b2 = fold(tp["bn2"])
    C = s0.shape[0]
    rd = tp["w_r"].shape[0]
    wdw = tp["w_dw"][:, 0].reshape(C, 9) * s1[:, None]          # BN1 scale folded per channel
    # (C, 16) slab: cols 0..8 dw taps, then bn0s, bn0b, bn1b, bn2b, be, bproj, pad
    vec = jnp.concatenate(
        [wdw, s0[:, None], b0[:, None], b1[:, None], b2[:, None],
         tp["b_e"][:, None], tp["b_p"][:, None],
         jnp.zeros((C, _VEC_WIDTH - 15), jnp.float32)], axis=1)
    wpw = tp["w_pw"][:, :, 0, 0] * s2[:, None]                  # BN2 scale folded per out-channel
    wproj = tp["w_p"][:, :, 0, 0]
    sew = jnp.concatenate([tp["w_r"][:, :, 0, 0].T,             # (C, rd)  wr^T
                           tp["w_e"][:, :, 0, 0]], axis=1)      # (C, rd)  we
    br = tp["b_r"].reshape(1, rd)
    return dict(vec=vec, wpw=wpw, wproj=wproj, sew=sew, br=br)


# ---------------------------------------------------------------------------
# Pure-JAX reference (mirrors the PyTorch module with unfolded parameters)
# ---------------------------------------------------------------------------
def mbconv_ref(x_nchw, tp, eps=1e-5):
    hp = jax.lax.Precision.HIGHEST
    x = jnp.transpose(x_nchw, (0, 2, 3, 1)).astype(jnp.float32)     # NHWC
    B, H, W, C = x.shape

    def bn(v, b):
        s = b["gamma"] * jax.lax.rsqrt(b["var"] + eps)
        return v * s + (b["beta"] - b["mean"] * s)

    y0 = bn(x, tp["bn0"])
    wdw = jnp.transpose(tp["w_dw"][:, 0], (1, 2, 0))                # (3, 3, C)
    y0p = jnp.pad(y0, ((0, 0), (1, 1), (1, 1), (0, 0)))
    acc = jnp.zeros_like(y0)
    for kh in range(3):
        for kw in range(3):
            acc = acc + y0p[:, kh:kh + H, kw:kw + W, :] * wdw[kh, kw]
    y1 = bn(acc, tp["bn1"])
    y2 = 0.5 * y1 * (1.0 + jax.lax.erf(y1 * _INV_SQRT2))            # exact torch GELU
    wpw = jnp.transpose(tp["w_pw"][:, :, 0, 0], (1, 0))             # (C_in, C_out)
    y4 = bn(jnp.einsum("bhwc,cd->bhwd", y2, wpw, precision=hp), tp["bn2"])
    y5 = y4 + y0
    s = jnp.mean(y5, axis=(1, 2), keepdims=True)
    s = jnp.maximum(jnp.einsum("bijc,rc->bijr", s, tp["w_r"][:, :, 0, 0],
                               precision=hp) + tp["b_r"], 0.0)
    s = jax.nn.sigmoid(jnp.einsum("bijr,cr->bijc", s, tp["w_e"][:, :, 0, 0],
                                  precision=hp) + tp["b_e"])
    y6 = y5 * s
    y7 = jnp.einsum("bhwc,dc->bhwd", y6, tp["w_p"][:, :, 0, 0],
                    precision=hp) + tp["b_p"]
    return jnp.transpose(y7 + x, (0, 3, 1, 2))


if __name__ == "__main__":
    key = jax.random.PRNGKey(0)
    kx, kp_key = jax.random.split(key)
    B, C, H, W = 2, 32, 16, 16          # in_channels == out_channels (downscale=False)
    x = jax.random.normal(kx, (B, C, H, W), jnp.float32)
    tparams = init_torch_params(kp_key, C)
    kparams = pack_params(tparams)

    out = jax.block_until_ready(mbconv_forward(x, kparams))
    ref = jax.block_until_ready(mbconv_ref(x, tparams))
    np.testing.assert_allclose(np.asarray(out), np.asarray(ref), rtol=1e-2, atol=1e-2)
    print("KERNEL_OK")
</pallas_src>

<mosaic_0001>
module attributes {stable_mosaic.version = 11 : i64} {
  func.func @_mbconv_kernel(%arg0: i32, %arg1: memref<2x32x256xf32, #tpu.memory_space<vmem>>, %arg2: memref<32x16xf32, #tpu.memory_space<vmem>>, %arg3: memref<32x32xf32, #tpu.memory_space<vmem>>, %arg4: memref<32x32xf32, #tpu.memory_space<vmem>>, %arg5: memref<32x16xf32, #tpu.memory_space<vmem>>, %arg6: memref<1x8xf32, #tpu.memory_space<vmem>>, %arg7: memref<2x32x256xf32, #tpu.memory_space<vmem>>) attributes {dimension_semantics = [#tpu.dimension_semantics<parallel>], iteration_bounds = array<i64: 1>, scalar_prefetch = 0 : i64, scratch_operands = 0 : i64, tpu.core_type = #tpu.core_type<tc>, window_params = [{transform_indices = @transform_0, window_bounds = array<i64: 2, 32, 256>}, {pipeline_mode = #tpu.pipeline_mode<synchronous>, transform_indices = @transform_1, window_bounds = array<i64: 32, 16>}, {pipeline_mode = #tpu.pipeline_mode<synchronous>, transform_indices = @transform_2, window_bounds = array<i64: 32, 32>}, {pipeline_mode = #tpu.pipeline_mode<synchronous>, transform_indices = @transform_3, window_bounds = array<i64: 32, 32>}, {pipeline_mode = #tpu.pipeline_mode<synchronous>, transform_indices = @transform_4, window_bounds = array<i64: 32, 16>}, {pipeline_mode = #tpu.pipeline_mode<synchronous>, transform_indices = @transform_5, window_bounds = array<i64: 1, 8>}, {transform_indices = @transform_6, window_bounds = array<i64: 2, 32, 256>}]} {
    %c0 = arith.constant 0 : index
    %c0_0 = arith.constant 0 : index
    %0 = vector.load %arg2[%c0, %c0_0] : memref<32x16xf32, #tpu.memory_space<vmem>>, vector<32x16xf32>
    %1 = vector.extract_strided_slice %0 {offsets = [0, 9], sizes = [32, 1], strides = [1, 1]} : vector<32x16xf32> to vector<32x1xf32>
    %2 = vector.extract_strided_slice %0 {offsets = [0, 10], sizes = [32, 1], strides = [1, 1]} : vector<32x16xf32> to vector<32x1xf32>
    %3 = vector.extract_strided_slice %0 {offsets = [0, 11], sizes = [32, 1], strides = [1, 1]} : vector<32x16xf32> to vector<32x1xf32>
    %4 = vector.extract_strided_slice %0 {offsets = [0, 12], sizes = [32, 1], strides = [1, 1]} : vector<32x16xf32> to vector<32x1xf32>
    %5 = vector.extract_strided_slice %0 {offsets = [0, 13], sizes = [32, 1], strides = [1, 1]} : vector<32x16xf32> to vector<32x1xf32>
    %6 = vector.extract_strided_slice %0 {offsets = [0, 14], sizes = [32, 1], strides = [1, 1]} : vector<32x16xf32> to vector<32x1xf32>
    %c0_1 = arith.constant 0 : index
    %c0_2 = arith.constant 0 : index
    %c0_3 = arith.constant 0 : index
    %7 = vector.load %arg1[%c0_1, %c0_2, %c0_3] : memref<2x32x256xf32, #tpu.memory_space<vmem>>, vector<1x32x256xf32>
    %8 = vector.shape_cast %7 : vector<1x32x256xf32> to vector<32x256xf32>
    %c1 = arith.constant 1 : index
    %c0_4 = arith.constant 0 : index
    %c0_5 = arith.constant 0 : index
    %9 = vector.load %arg1[%c1, %c0_4, %c0_5] : memref<2x32x256xf32, #tpu.memory_space<vmem>>, vector<1x32x256xf32>
    %10 = vector.shape_cast %9 : vector<1x32x256xf32> to vector<32x256xf32>
    %11 = tpu.concatenate %8, %10 in 1 : vector<32x256xf32>, vector<32x256xf32> -> vector<32x512xf32>
    %12 = vector.broadcast %1 : vector<32x1xf32> to vector<32x512xf32>
    %13 = arith.mulf %11, %12 : vector<32x512xf32>
    %14 = vector.broadcast %2 : vector<32x1xf32> to vector<32x512xf32>
    %15 = arith.addf %13, %14 : vector<32x512xf32>
    %16 = tpu.iota {dimensions = array<i32: 1>} : vector<1x512xi32>
    %c15_i32 = arith.constant 15 : i32
    %17 = vector.broadcast %c15_i32 : i32 to vector<1x512xi32>
    %18 = arith.andi %16, %17 : vector<1x512xi32>
    %c255_i32 = arith.constant 255 : i32
    %19 = vector.broadcast %c255_i32 : i32 to vector<1x512xi32>
    %20 = arith.andi %16, %19 : vector<1x512xi32>
    %c15_i32_6 = arith.constant 15 : i32
    %21 = vector.broadcast %c15_i32_6 : i32 to vector<1x512xi32>
    %22 = arith.cmpi ne, %18, %21 : vector<1x512xi32>
    %c0_i32 = arith.constant 0 : i32
    %23 = vector.broadcast %c0_i32 : i32 to vector<1x512xi32>
    %24 = arith.cmpi ne, %18, %23 : vector<1x512xi32>
    %c240_i32 = arith.constant 240 : i32
    %25 = vector.broadcast %c240_i32 : i32 to vector<1x512xi32>
    %26 = arith.cmpi slt, %20, %25 : vector<1x512xi32>
    %c16_i32 = arith.constant 16 : i32
    %27 = vector.broadcast %c16_i32 : i32 to vector<1x512xi32>
    %28 = arith.cmpi sge, %20, %27 : vector<1x512xi32>
    %cst = arith.constant 0.000000e+00 : f32
    %29 = vector.shape_cast %22 : vector<1x512xi1> to vector<1x512xi1>
    %30 = vector.broadcast %29 : vector<1x512xi1> to vector<32x512xi1>
    %31 = vector.broadcast %cst : f32 to vector<32x512xf32>
    %32 = arith.select %30, %15, %31 : vector<32x512xi1>, vector<32x512xf32>
    %c1_i32 = arith.constant 1 : i32
    %33 = tpu.dynamic_rotate %32 by %c1_i32 dim 1 : vector<32x512xf32>, i32 -> vector<32x512xf32>
    %cst_7 = arith.constant 0.000000e+00 : f32
    %34 = vector.shape_cast %24 : vector<1x512xi1> to vector<1x512xi1>
    %35 = vector.broadcast %34 : vector<1x512xi1> to vector<32x512xi1>
    %36 = vector.broadcast %cst_7 : f32 to vector<32x512xf32>
    %37 = arith.select %35, %15, %36 : vector<32x512xi1>, vector<32x512xf32>
    %c511_i32 = arith.constant 511 : i32
    %38 = tpu.dynamic_rotate %37 by %c511_i32 dim 1 : vector<32x512xf32>, i32 -> vector<32x512xf32>
    %39 = vector.extract_strided_slice %0 {offsets = [0, 3], sizes = [32, 1], strides = [1, 1]} : vector<32x16xf32> to vector<32x1xf32>
    %40 = vector.broadcast %39 : vector<32x1xf32> to vector<32x512xf32>
    %41 = arith.mulf %33, %40 : vector<32x512xf32>
    %42 = vector.extract_strided_slice %0 {offsets = [0, 4], sizes = [32, 1], strides = [1, 1]} : vector<32x16xf32> to vector<32x1xf32>
    %43 = vector.broadcast %42 : vector<32x1xf32> to vector<32x512xf32>
    %44 = arith.mulf %15, %43 : vector<32x512xf32>
    %45 = arith.addf %41, %44 : vector<32x512xf32>
    %46 = vector.extract_strided_slice %0 {offsets = [0, 5], sizes = [32, 1], strides = [1, 1]} : vector<32x16xf32> to vector<32x1xf32>
    %47 = vector.broadcast %46 : vector<32x1xf32> to vector<32x512xf32>
    %48 = arith.mulf %38, %47 : vector<32x512xf32>
    %49 = arith.addf %45, %48 : vector<32x512xf32>
    %50 = vector.extract_strided_slice %0 {offsets = [0, 0], sizes = [32, 1], strides = [1, 1]} : vector<32x16xf32> to vector<32x1xf32>
    %51 = vector.broadcast %50 : vector<32x1xf32> to vector<32x512xf32>
    %52 = arith.mulf %33, %51 : vector<32x512xf32>
    %53 = vector.extract_strided_slice %0 {offsets = [0, 1], sizes = [32, 1], strides = [1, 1]} : vector<32x16xf32> to vector<32x1xf32>
    %54 = vector.broadcast %53 : vector<32x1xf32> to vector<32x512xf32>
    %55 = arith.mulf %15, %54 : vector<32x512xf32>
    %56 = arith.addf %52, %55 : vector<32x512xf32>
    %57 = vector.extract_strided_slice %0 {offsets = [0, 2], sizes = [32, 1], strides = [1, 1]} : vector<32x16xf32> to vector<32x1xf32>
    %58 = vector.broadcast %57 : vector<32x1xf32> to vector<32x512xf32>
    %59 = arith.mulf %38, %58 : vector<32x512xf32>
    %60 = arith.addf %56, %59 : vector<32x512xf32>
    %cst_8 = arith.constant 0.000000e+00 : f32
    %61 = vector.shape_cast %26 : vector<1x512xi1> to vector<1x512xi1>
    %62 = vector.broadcast %61 : vector<1x512xi1> to vector<32x512xi1>
    %63 = vector.broadcast %cst_8 : f32 to vector<32x512xf32>
    %64 = arith.select %62, %60, %63 : vector<32x512xi1>, vector<32x512xf32>
    %c16_i32_9 = arith.constant 16 : i32
    %65 = tpu.dynamic_rotate %64 by %c16_i32_9 dim 1 : vector<32x512xf32>, i32 -> vector<32x512xf32>
    %66 = arith.addf %49, %65 : vector<32x512xf32>
    %67 = vector.extract_strided_slice %0 {offsets = [0, 6], sizes = [32, 1], strides = [1, 1]} : vector<32x16xf32> to vector<32x1xf32>
    %68 = vector.broadcast %67 : vector<32x1xf32> to vector<32x512xf32>
    %69 = arith.mulf %33, %68 : vector<32x512xf32>
    %70 = vector.extract_strided_slice %0 {offsets = [0, 7], sizes = [32, 1], strides = [1, 1]} : vector<32x16xf32> to vector<32x1xf32>
    %71 = vector.broadcast %70 : vector<32x1xf32> to vector<32x512xf32>
    %72 = arith.mulf %15, %71 : vector<32x512xf32>
    %73 = arith.addf %69, %72 : vector<32x512xf32>
    %74 = vector.extract_strided_slice %0 {offsets = [0, 8], sizes = [32, 1], strides = [1, 1]} : vector<32x16xf32> to vector<32x1xf32>
    %75 = vector.broadcast %74 : vector<32x1xf32> to vector<32x512xf32>
    %76 = arith.mulf %38, %75 : vector<32x512xf32>
    %77 = arith.addf %73, %76 : vector<32x512xf32>
    %cst_10 = arith.constant 0.000000e+00 : f32
    %78 = vector.shape_cast %28 : vector<1x512xi1> to vector<1x512xi1>
    %79 = vector.broadcast %78 : vector<1x512xi1> to vector<32x512xi1>
    %80 = vector.broadcast %cst_10 : f32 to vector<32x512xf32>
    %81 = arith.select %79, %77, %80 : vector<32x512xi1>, vector<32x512xf32>
    %c496_i32 = arith.constant 496 : i32
    %82 = tpu.dynamic_rotate %81 by %c496_i32 dim 1 : vector<32x512xf32>, i32 -> vector<32x512xf32>
    %83 = arith.addf %66, %82 : vector<32x512xf32>
    %84 = vector.broadcast %3 : vector<32x1xf32> to vector<32x512xf32>
    %85 = arith.addf %83, %84 : vector<32x512xf32>
    %cst_11 = arith.constant 5.000000e-01 : f32
    %86 = vector.broadcast %cst_11 : f32 to vector<32x512xf32>
    %87 = arith.mulf %86, %85 : vector<32x512xf32>
    %cst_12 = arith.constant 0.707106769 : f32
    %88 = vector.broadcast %cst_12 : f32 to vector<32x512xf32>
    %89 = arith.mulf %85, %88 : vector<32x512xf32>
    %cst_13 = arith.constant -4.000000e+00 : f32
    %cst_14 = arith.constant 4.000000e+00 : f32
    %90 = vector.broadcast %cst_13 : f32 to vector<32x512xf32>
    %91 = arith.maximumf %90, %89 : vector<32x512xf32>
    %92 = vector.broadcast %cst_14 : f32 to vector<32x512xf32>
    %93 = arith.minimumf %92, %91 : vector<32x512xf32>
    %94 = arith.mulf %93, %93 : vector<32x512xf32>
    %cst_15 = arith.constant -2.72614237E-10 : f32
    %95 = vector.broadcast %cst_15 : f32 to vector<32x512xf32>
    %96 = arith.mulf %94, %95 : vector<32x512xf32>
    %cst_16 = arith.constant 2.77068146E-8 : f32
    %97 = vector.broadcast %cst_16 : f32 to vector<32x512xf32>
    %98 = arith.addf %96, %97 : vector<32x512xf32>
    %99 = arith.mulf %94, %98 : vector<32x512xf32>
    %cst_17 = arith.constant -2.10102394E-6 : f32
    %100 = vector.broadcast %cst_17 : f32 to vector<32x512xf32>
    %101 = arith.addf %99, %100 : vector<32x512xf32>
    %102 = arith.mulf %94, %101 : vector<32x512xf32>
    %cst_18 = arith.constant -5.69250624E-5 : f32
    %103 = vector.broadcast %cst_18 : f32 to vector<32x512xf32>
    %104 = arith.addf %102, %103 : vector<32x512xf32>
    %105 = arith.mulf %94, %104 : vector<32x512xf32>
    %cst_19 = arith.constant -7.34990637E-4 : f32
    %106 = vector.broadcast %cst_19 : f32 to vector<32x512xf32>
    %107 = arith.addf %105, %106 : vector<32x512xf32>
    %108 = arith.mulf %94, %107 : vector<32x512xf32>
    %cst_20 = arith.constant -2.954600e-03 : f32
    %109 = vector.broadcast %cst_20 : f32 to vector<32x512xf32>
    %110 = arith.addf %108, %109 : vector<32x512xf32>
    %111 = arith.mulf %94, %110 : vector<32x512xf32>
    %cst_21 = arith.constant -0.0160960332 : f32
    %112 = vector.broadcast %cst_21 : f32 to vector<32x512xf32>
    %113 = arith.addf %111, %112 : vector<32x512xf32>
    %114 = arith.mulf %93, %113 : vector<32x512xf32>
    %cst_22 = arith.constant -1.45660715E-5 : f32
    %115 = vector.broadcast %cst_22 : f32 to vector<32x512xf32>
    %116 = arith.mulf %94, %115 : vector<32x512xf32>
    %cst_23 = arith.constant -2.13374049E-4 : f32
    %117 = vector.broadcast %cst_23 : f32 to vector<32x512xf32>
    %118 = arith.addf %116, %117 : vector<32x512xf32>
    %119 = arith.mulf %94, %118 : vector<32x512xf32>
    %cst_24 = arith.constant -0.00168282702 : f32
    %120 = vector.broadcast %cst_24 : f32 to vector<32x512xf32>
    %121 = arith.addf %119, %120 : vector<32x512xf32>
    %122 = arith.mulf %94, %121 : vector<32x512xf32>
    %cst_25 = arith.constant -0.00737332925 : f32
    %123 = vector.broadcast %cst_25 : f32 to vector<32x512xf32>
    %124 = arith.addf %122, %123 : vector<32x512xf32>
    %125 = arith.mulf %94, %124 : vector<32x512xf32>
    %cst_26 = arith.constant -0.0142647391 : f32
    %126 = vector.broadcast %cst_26 : f32 to vector<32x512xf32>
    %127 = arith.addf %125, %126 : vector<32x512xf32>
    %128 = tpu.reciprocal %127 {approx = true} : vector<32x512xf32> -> vector<32x512xf32>
    %129 = arith.mulf %114, %128 : vector<32x512xf32>
    %cst_27 = arith.constant 1.000000e+00 : f32
    %130 = vector.broadcast %cst_27 : f32 to vector<32x512xf32>
    %131 = arith.addf %130, %129 : vector<32x512xf32>
    %132 = arith.mulf %87, %131 : vector<32x512xf32>
    %c0_28 = arith.constant 0 : index
    %c0_29 = arith.constant 0 : index
    %133 = vector.load %arg3[%c0_28, %c0_29] : memref<32x32xf32, #tpu.memory_space<vmem>>, vector<32x32xf32>
    %cst_30 = arith.constant dense<0.000000e+00> : vector<32x512xf32>
    %134 = tpu.matmul %133, %132, %cst_30 {dimension_numbers = #tpu.dot_dimension_numbers<[1], [0], [0], [1], [0, 0, 1, 1], [], []>} : vector<32x32xf32>, vector<32x512xf32>, vector<32x512xf32> -> vector<32x512xf32>
    %135 = vector.broadcast %4 : vector<32x1xf32> to vector<32x512xf32>
    %136 = arith.addf %134, %135 : vector<32x512xf32>
    %c0_31 = arith.constant 0 : index
    %c0_32 = arith.constant 0 : index
    %c0_33 = arith.constant 0 : index
    %137 = vector.load %arg1[%c0_31, %c0_32, %c0_33] : memref<2x32x256xf32, #tpu.memory_space<vmem>>, vector<1x32x256xf32>
    %138 = vector.shape_cast %137 : vector<1x32x256xf32> to vector<32x256xf32>
    %c1_34 = arith.constant 1 : index
    %c0_35 = arith.constant 0 : index
    %c0_36 = arith.constant 0 : index
    %139 = vector.load %arg1[%c1_34, %c0_35, %c0_36] : memref<2x32x256xf32, #tpu.memory_space<vmem>>, vector<1x32x256xf32>
    %140 = vector.shape_cast %139 : vector<1x32x256xf32> to vector<32x256xf32>
    %141 = tpu.concatenate %138, %140 in 1 : vector<32x256xf32>, vector<32x256xf32> -> vector<32x512xf32>
    %142 = vector.broadcast %1 : vector<32x1xf32> to vector<32x512xf32>
    %143 = arith.mulf %141, %142 : vector<32x512xf32>
    %144 = vector.broadcast %2 : vector<32x1xf32> to vector<32x512xf32>
    %145 = arith.addf %143, %144 : vector<32x512xf32>
    %146 = arith.addf %136, %145 : vector<32x512xf32>
    %c0_37 = arith.constant 0 : index
    %c0_38 = arith.constant 0 : index
    %147 = vector.load %arg5[%c0_37, %c0_38] : memref<32x16xf32, #tpu.memory_space<vmem>>, vector<32x16xf32>
    %148 = vector.extract_strided_slice %147 {offsets = [0, 0], sizes = [32, 8], strides = [1, 1]} : vector<32x16xf32> to vector<32x8xf32>
    %149 = vector.extract_strided_slice %147 {offsets = [0, 8], sizes = [32, 8], strides = [1, 1]} : vector<32x16xf32> to vector<32x8xf32>
    %c0_39 = arith.constant 0 : index
    %c0_40 = arith.constant 0 : index
    %150 = vector.load %arg6[%c0_39, %c0_40] : memref<1x8xf32, #tpu.memory_space<vmem>>, vector<1x8xf32>
    %151 = vector.extract_strided_slice %146 {offsets = [0, 0], sizes = [32, 256], strides = [1, 1]} : vector<32x512xf32> to vector<32x256xf32>
    %cst_41 = arith.constant dense<0.000000e+00> : vector<32xf32>
    %152 = vector.multi_reduction <add>, %151, %cst_41 [1] : vector<32x256xf32> to vector<32xf32>
    %153 = vector.shape_cast %152 : vector<32xf32> to vector<32x1xf32>
    %cst_42 = arith.constant 2.560000e+02 : f32
    %154 = vector.broadcast %cst_42 : f32 to vector<32x1xf32>
    %155 = arith.divf %153, %154 : vector<32x1xf32>
    %156 = vector.broadcast %155 : vector<32x1xf32> to vector<32x8xf32>
    %157 = arith.mulf %148, %156 : vector<32x8xf32>
    %cst_43 = arith.constant dense<0.000000e+00> : vector<8xf32>
    %158 = vector.multi_reduction <add>, %157, %cst_43 [0] : vector<32x8xf32> to vector<8xf32>
    %159 = vector.shape_cast %158 : vector<8xf32> to vector<1x8xf32>
    %160 = arith.addf %159, %150 : vector<1x8xf32>
    %cst_44 = arith.constant 0.000000e+00 : f32
    %161 = vector.broadcast %cst_44 : f32 to vector<1x8xf32>
    %162 = arith.maximumf %160, %161 : vector<1x8xf32>
    %163 = vector.broadcast %162 : vector<1x8xf32> to vector<32x8xf32>
    %164 = arith.mulf %149, %163 : vector<32x8xf32>
    %cst_45 = arith.constant dense<0.000000e+00> : vector<32xf32>
    %165 = vector.multi_reduction <add>, %164, %cst_45 [1] : vector<32x8xf32> to vector<32xf32>
    %166 = vector.shape_cast %165 : vector<32xf32> to vector<32x1xf32>
    %167 = arith.addf %166, %5 : vector<32x1xf32>
    %168 = arith.negf %167 : vector<32x1xf32>
    %169 = math.exp %168 : vector<32x1xf32>
    %cst_46 = arith.constant 1.000000e+00 : f32
    %170 = vector.broadcast %cst_46 : f32 to vector<32x1xf32>
    %171 = arith.addf %170, %169 : vector<32x1xf32>
    %172 = arith.divf %170, %171 : vector<32x1xf32>
    %173 = vector.broadcast %172 : vector<32x1xf32> to vector<32x256xf32>
    %174 = arith.mulf %151, %173 : vector<32x256xf32>
    %175 = vector.extract_strided_slice %146 {offsets = [0, 256], sizes = [32, 256], strides = [1, 1]} : vector<32x512xf32> to vector<32x256xf32>
    %cst_47 = arith.constant dense<0.000000e+00> : vector<32xf32>
    %176 = vector.multi_reduction <add>, %175, %cst_47 [1] : vector<32x256xf32> to vector<32xf32>
    %177 = vector.shape_cast %176 : vector<32xf32> to vector<32x1xf32>
    %cst_48 = arith.constant 2.560000e+02 : f32
    %178 = vector.broadcast %cst_48 : f32 to vector<32x1xf32>
    %179 = arith.divf %177, %178 : vector<32x1xf32>
    %180 = vector.broadcast %179 : vector<32x1xf32> to vector<32x8xf32>
    %181 = arith.mulf %148, %180 : vector<32x8xf32>
    %cst_49 = arith.constant dense<0.000000e+00> : vector<8xf32>
    %182 = vector.multi_reduction <add>, %181, %cst_49 [0] : vector<32x8xf32> to vector<8xf32>
    %183 = vector.shape_cast %182 : vector<8xf32> to vector<1x8xf32>
    %184 = arith.addf %183, %150 : vector<1x8xf32>
    %cst_50 = arith.constant 0.000000e+00 : f32
    %185 = vector.broadcast %cst_50 : f32 to vector<1x8xf32>
    %186 = arith.maximumf %184, %185 : vector<1x8xf32>
    %187 = vector.broadcast %186 : vector<1x8xf32> to vector<32x8xf32>
    %188 = arith.mulf %149, %187 : vector<32x8xf32>
    %cst_51 = arith.constant dense<0.000000e+00> : vector<32xf32>
    %189 = vector.multi_reduction <add>, %188, %cst_51 [1] : vector<32x8xf32> to vector<32xf32>
    %190 = vector.shape_cast %189 : vector<32xf32> to vector<32x1xf32>
    %191 = arith.addf %190, %5 : vector<32x1xf32>
    %192 = arith.negf %191 : vector<32x1xf32>
    %193 = math.exp %192 : vector<32x1xf32>
    %cst_52 = arith.constant 1.000000e+00 : f32
    %194 = vector.broadcast %cst_52 : f32 to vector<32x1xf32>
    %195 = arith.addf %194, %193 : vector<32x1xf32>
    %196 = arith.divf %194, %195 : vector<32x1xf32>
    %197 = vector.broadcast %196 : vector<32x1xf32> to vector<32x256xf32>
    %198 = arith.mulf %175, %197 : vector<32x256xf32>
    %199 = tpu.concatenate %174, %198 in 1 : vector<32x256xf32>, vector<32x256xf32> -> vector<32x512xf32>
    %c0_53 = arith.constant 0 : index
    %c0_54 = arith.constant 0 : index
    %200 = vector.load %arg4[%c0_53, %c0_54] : memref<32x32xf32, #tpu.memory_space<vmem>>, vector<32x32xf32>
    %cst_55 = arith.constant dense<0.000000e+00> : vector<32x512xf32>
    %201 = tpu.matmul %200, %199, %cst_55 {dimension_numbers = #tpu.dot_dimension_numbers<[1], [0], [0], [1], [0, 0, 1, 1], [], []>} : vector<32x32xf32>, vector<32x512xf32>, vector<32x512xf32> -> vector<32x512xf32>
    %202 = vector.broadcast %6 : vector<32x1xf32> to vector<32x512xf32>
    %203 = arith.addf %201, %202 : vector<32x512xf32>
    %204 = vector.extract_strided_slice %203 {offsets = [0, 0], sizes = [32, 256], strides = [1, 1]} : vector<32x512xf32> to vector<32x256xf32>
    %c0_56 = arith.constant 0 : index
    %c0_57 = arith.constant 0 : index
    %c0_58 = arith.constant 0 : index
    %205 = vector.load %arg1[%c0_56, %c0_57, %c0_58] : memref<2x32x256xf32, #tpu.memory_space<vmem>>, vector<1x32x256xf32>
    %206 = vector.shape_cast %205 : vector<1x32x256xf32> to vector<32x256xf32>
    %207 = arith.addf %204, %206 : vector<32x256xf32>
    %c0_59 = arith.constant 0 : index
    %c0_60 = arith.constant 0 : index
    %c0_61 = arith.constant 0 : index
    %208 = vector.load %arg7[%c0_59, %c0_60, %c0_61] : memref<2x32x256xf32, #tpu.memory_space<vmem>>, vector<1x32x256xf32>
    %209 = vector.shape_cast %208 : vector<1x32x256xf32> to vector<32x256xf32>
    %210 = vector.shape_cast %207 : vector<32x256xf32> to vector<1x32x256xf32>
    tpu.vector_store %arg7[%c0_59, %c0_60, %c0_61], %210 {strides = array<i32>} : memref<2x32x256xf32, #tpu.memory_space<vmem>>, vector<1x32x256xf32>,
    %211 = vector.extract_strided_slice %203 {offsets = [0, 256], sizes = [32, 256], strides = [1, 1]} : vector<32x512xf32> to vector<32x256xf32>
    %c1_62 = arith.constant 1 : index
    %c0_63 = arith.constant 0 : index
    %c0_64 = arith.constant 0 : index
    %212 = vector.load %arg1[%c1_62, %c0_63, %c0_64] : memref<2x32x256xf32, #tpu.memory_space<vmem>>, vector<1x32x256xf32>
    %213 = vector.shape_cast %212 : vector<1x32x256xf32> to vector<32x256xf32>
    %214 = arith.addf %211, %213 : vector<32x256xf32>
    %c1_65 = arith.constant 1 : index
    %c0_66 = arith.constant 0 : index
    %c0_67 = arith.constant 0 : index
    %215 = vector.load %arg7[%c1_65, %c0_66, %c0_67] : memref<2x32x256xf32, #tpu.memory_space<vmem>>, vector<1x32x256xf32>
    %216 = vector.shape_cast %215 : vector<1x32x256xf32> to vector<32x256xf32>
    %217 = vector.shape_cast %214 : vector<32x256xf32> to vector<1x32x256xf32>
    tpu.vector_store %arg7[%c1_65, %c0_66, %c0_67], %217 {strides = array<i32>} : memref<2x32x256xf32, #tpu.memory_space<vmem>>, vector<1x32x256xf32>,
    return
  }
  func.func @transform_0(%arg0: i32) -> (i32, i32, i32) {
    %c0_i32 = arith.constant 0 : i32
    %c0_i32_0 = arith.constant 0 : i32
    %c0_i32_1 = arith.constant 0 : i32
    return %arg0, %c0_i32, %c0_i32_0 : i32, i32, i32
  }
  func.func @transform_1(%arg0: i32) -> (i32, i32) {
    %c0_i32 = arith.constant 0 : i32
    %c0_i32_0 = arith.constant 0 : i32
    %c0_i32_1 = arith.constant 0 : i32
    return %c0_i32, %c0_i32_0 : i32, i32
  }
  func.func @transform_2(%arg0: i32) -> (i32, i32) {
    %c0_i32 = arith.constant 0 : i32
    %c0_i32_0 = arith.constant 0 : i32
    %c0_i32_1 = arith.constant 0 : i32
    return %c0_i32, %c0_i32_0 : i32, i32
  }
  func.func @transform_3(%arg0: i32) -> (i32, i32) {
    %c0_i32 = arith.constant 0 : i32
    %c0_i32_0 = arith.constant 0 : i32
    %c0_i32_1 = arith.constant 0 : i32
    return %c0_i32, %c0_i32_0 : i32, i32
  }
  func.func @transform_4(%arg0: i32) -> (i32, i32) {
    %c0_i32 = arith.constant 0 : i32
    %c0_i32_0 = arith.constant 0 : i32
    %c0_i32_1 = arith.constant 0 : i32
    return %c0_i32, %c0_i32_0 : i32, i32
  }
  func.func @transform_5(%arg0: i32) -> (i32, i32) {
    %c0_i32 = arith.constant 0 : i32
    %c0_i32_0 = arith.constant 0 : i32
    %c0_i32_1 = arith.constant 0 : i32
    return %c0_i32, %c0_i32_0 : i32, i32
  }
  func.func @transform_6(%arg0: i32) -> (i32, i32, i32) {
    %c0_i32 = arith.constant 0 : i32
    %c0_i32_0 = arith.constant 0 : i32
    %c0_i32_1 = arith.constant 0 : i32
    return %arg0, %c0_i32, %c0_i32_0 : i32, i32, i32
  }
}

</mosaic_0001>

<llo_original>
// kernel: tpu_custom_call.1
$region0: #{tpu_custom_call.1}
  #allocation0 [shape = 'u32[]', space=smem, size = 0x4, offset = 0x4, fixed_abs, tag = 'smem constant byte address 0x4 - core index']
  #allocation1 [shape = 'u32[144,128]{1,0:T(1,128)}', space=vmem, size = 0x12000, scoped, tag = 'internal scratch']
  %s0 = inlined_call_operand.hbm [shape: f32[2,32,256], index: 0, kind: input, shape index: {}]
  %s1 = inlined_call_operand.vmem [shape: f32[32,16], index: 1, kind: input, shape index: {}]
  %s2 = inlined_call_operand.vmem [shape: f32[32,32], index: 2, kind: input, shape index: {}]
  %s3 = inlined_call_operand.vmem [shape: f32[32,32], index: 3, kind: input, shape index: {}]
  %s4 = inlined_call_operand.vmem [shape: f32[32,16], index: 4, kind: input, shape index: {}]
  %s5 = inlined_call_operand.vmem [shape: f32[1,8], index: 5, kind: input, shape index: {}]
  %s6 = inlined_call_operand.hbm [shape: f32[2,32,256], index: 6, kind: output, shape index: {}]
  %s7 = sld [smem:[#allocation0]]
  $region38: #{tpu_custom_call.1} parent=0
    _
  %s9 = ssub.s32 1, %s7
  %s10 = scalar_select 0, %s9, %s7
  $region1: #{tpu_custom_call.1} parent=0
    #allocation2 [shape = 'u8[65536]{0}', space=vmem, size = 0x10000, scoped, tag = 'input window, operand 0, single buffered']
    #allocation3 [shape = 's32[1]{0}', space=sflag, size = 0x4, scoped, tag = 'scoped memory for tpu_custom_call.1']
    #allocation4 [shape = 's32[1]{0}', space=sflag, size = 0x4, scoped, tag = 'scoped memory for tpu_custom_call.1']
    #allocation5 [shape = 'u8[65536]{0}', space=vmem, size = 0x10000, scoped, tag = 'output window, operand 0, single buffered']
    %11 = vsyncpa [#allocation3], 0
    %12 = vsyncpa [#allocation4], 0
    // Predicated region
    $region2: #{tpu_custom_call.1} parent=1 // pred_check
      _
    $region3: #{tpu_custom_call.1} parent=1 // pred_check_branch
      %14 = sbr.rel (0) target = $region5
    $region4: #{tpu_custom_call.1} parent=1 // pred_region
      %s16 = ssub.s32 2048, 2048
      %17 = vsyncadd [#allocation3], %s16
      %s18 = sshll.u32 [#allocation2], 4
      %s19 = int_to_ptr.vmem [resolvable:$true] %s18
      %24 = dma.hbm_to_vmem [thread:$0]  %s0, 2048, %s19, [#allocation3], 256, 256, 16
    $region5: #{tpu_custom_call.1} parent=1 // pred_fallthru
      _
    // Predicated region
    $region6: #{tpu_custom_call.1} parent=1 // pred_check
      _
    $region7: #{tpu_custom_call.1} parent=1 // pred_check_branch
      %26 = sbr.rel (0) target = $region9
    $region8: #{tpu_custom_call.1} parent=1 // pred_region
      _
    $region9: #{tpu_custom_call.1} parent=1 // pred_fallthru
      _
    // Predicated region
    $region10: #{tpu_custom_call.1} parent=1 // pred_check
      _
    $region11: #{tpu_custom_call.1} parent=1 // pred_check_branch
      %28 = sbr.rel (0) target = $region13
    $region12: #{tpu_custom_call.1} parent=1 // pred_region
      _
    $region13: #{tpu_custom_call.1} parent=1 // pred_fallthru
      _
    // Predicated region
    $region14: #{tpu_custom_call.1} parent=1 // pred_check
      _
    $region15: #{tpu_custom_call.1} parent=1 // pred_check_branch
      %30 = sbr.rel (0) target = $region17
    $region16: #{tpu_custom_call.1} parent=1 // pred_region
      _
    $region17: #{tpu_custom_call.1} parent=1 // pred_fallthru
      _
    // Predicated region
    $region18: #{tpu_custom_call.1} parent=1 // pred_check
      _
    $region19: #{tpu_custom_call.1} parent=1 // pred_check_branch
      %32 = sbr.rel (0) target = $region21
    $region20: #{tpu_custom_call.1} parent=1 // pred_region
      _
    $region21: #{tpu_custom_call.1} parent=1 // pred_fallthru
      _
    // Predicated region
    $region22: #{tpu_custom_call.1} parent=1 // pred_check
      _
    $region23: #{tpu_custom_call.1} parent=1 // pred_check_branch
      %34 = sbr.rel (0) target = $region25
    $region24: #{tpu_custom_call.1} parent=1 // pred_region
      _
    $region25: #{tpu_custom_call.1} parent=1 // pred_fallthru
      _
    // Predicated region
    $region26: #{tpu_custom_call.1} parent=1 // pred_check
      _
    $region27: #{tpu_custom_call.1} parent=1 // pred_check_branch
      %36 = sbr.rel (0) target = $region29
    $region28: #{tpu_custom_call.1} parent=1 // pred_region
      %37 = dma.done [#allocation3], 2048
    $region29: #{tpu_custom_call.1} parent=1 // pred_fallthru
      _
    %v38 = vld [vmem:[%s1] sm:$0xff]
    %v39 = vld [vmem:[%s1 + $0x8] sm:$0xff]
    %v40 = vld [vmem:[%s1 + $0x10] sm:$0xff]
    %v41 = vld [vmem:[%s1 + $0x18] sm:$0xff]
    %v42 = vld [vmem:[#allocation2] sm:$0xff]
    %v43 = vld [vmem:[#allocation2 + $0x8] sm:$0xff]
    %v44 = vld [vmem:[#allocation2 + $0x10] sm:$0xff]
    %v45 = vld [vmem:[#allocation2 + $0x18] sm:$0xff]
    %v46 = vld [vmem:[#allocation2 + $0x20] sm:$0xff]
    %v47 = vld [vmem:[#allocation2 + $0x28] sm:$0xff]
    %v48 = vld [vmem:[#allocation2 + $0x30] sm:$0xff]
    %v49 = vld [vmem:[#allocation2 + $0x38] sm:$0xff]
    %s50 = scalar_lea.vmem [#allocation2], 64
    %v51 = vld [vmem:[%s50] sm:$0xff]
    %v52 = vld [vmem:[%s50 + $0x8] sm:$0xff]
    %v53 = vld [vmem:[%s50 + $0x10] sm:$0xff]
    %v54 = vld [vmem:[%s50 + $0x18] sm:$0xff]
    %v55 = vld [vmem:[%s50 + $0x20] sm:$0xff]
    %v56 = vld [vmem:[%s50 + $0x28] sm:$0xff]
    %v57 = vld [vmem:[%s50 + $0x30] sm:$0xff]
    %v58 = vld [vmem:[%s50 + $0x38] sm:$0xff]
    %60 = vset.pattern.permute.xlu0 9
    %61 = vperm.xlu0 %60, %v38
    %v62 = vpop.permute.xlu0 %61
    %65 = vset.pattern.permute.xlu0 9
    %66 = vperm.xlu0 %65, %v39
    %v67 = vpop.permute.xlu0 %66
    %70 = vset.pattern.permute.xlu0 9
    %71 = vperm.xlu0 %70, %v40
    %v72 = vpop.permute.xlu0 %71
    %75 = vset.pattern.permute.xlu0 9
    %76 = vperm.xlu0 %75, %v41
    %v77 = vpop.permute.xlu0 %76
    %v79 = vmul.f32 %v42, %v62
    %v80 = vmul.f32 %v43, %v62
    %v81 = vmul.f32 %v51, %v62
    %v82 = vmul.f32 %v52, %v62
    %v83 = vmul.f32 %v44, %v67
    %v84 = vmul.f32 %v45, %v67
    %v85 = vmul.f32 %v53, %v67
    %v86 = vmul.f32 %v54, %v67
    %v87 = vmul.f32 %v46, %v72
    %v88 = vmul.f32 %v47, %v72
    %v89 = vmul.f32 %v55, %v72
    %v90 = vmul.f32 %v56, %v72
    %v91 = vmul.f32 %v48, %v77
    %v92 = vmul.f32 %v49, %v77
    %v93 = vmul.f32 %v57, %v77
    %v94 = vmul.f32 %v58, %v77
    %95 = vset.pattern.permute.xlu0 10
    %96 = vperm.xlu0 %95, %v38
    %v97 = vpop.permute.xlu0 %96
    %99 = vset.pattern.permute.xlu0 10
    %100 = vperm.xlu0 %99, %v39
    %v101 = vpop.permute.xlu0 %100
    %103 = vset.pattern.permute.xlu0 10
    %104 = vperm.xlu0 %103, %v40
    %v105 = vpop.permute.xlu0 %104
    %107 = vset.pattern.permute.xlu0 10
    %108 = vperm.xlu0 %107, %v41
    %v109 = vpop.permute.xlu0 %108
    %v111 = vadd.f32 %v79, %v97
    %v112 = vadd.f32 %v80, %v97
    %v113 = vadd.f32 %v81, %v97
    %v114 = vadd.f32 %v82, %v97
    %v115 = vadd.f32 %v83, %v101
    %v116 = vadd.f32 %v84, %v101
    %v117 = vadd.f32 %v85, %v101
    %v118 = vadd.f32 %v86, %v101
    %v119 = vadd.f32 %v87, %v105
    %v120 = vadd.f32 %v88, %v105
    %v121 = vadd.f32 %v89, %v105
    %v122 = vadd.f32 %v90, %v105
    %v123 = vadd.f32 %v91, %v109
    %v124 = vadd.f32 %v92, %v109
    %v125 = vadd.f32 %v93, %v109
    %v126 = vadd.f32 %v94, %v109
    %v127 = vlaneseq
    %v128 = vand.u32 %v127, 127
    %v129 = vadd.s32 %v128, 128
    %v130 = vadd.s32 %v128, 256
    %v131 = vadd.s32 %v128, 384
    %v132 = vand.u32 %v128, 15
    %v133 = vand.u32 %v129, 15
    %v134 = vand.u32 %v130, 15
    %v135 = vand.u32 %v131, 15
    %v136 = vand.u32 %v128, 255
    %v137 = vand.u32 %v129, 255
    %v138 = vand.u32 %v130, 255
    %v139 = vand.u32 %v131, 255
    %vm140 = vcmp.ne.s32.totalorder %v132, 15
    %vm141 = vcmp.ne.s32.totalorder %v133, 15
    %vm142 = vcmp.ne.s32.totalorder %v134, 15
    %vm143 = vcmp.ne.s32.totalorder %v135, 15
    %vm144 = vcmp.ne.s32.totalorder %v132, 0
    %vm145 = vcmp.ne.s32.totalorder %v133, 0
    %vm146 = vcmp.ne.s32.totalorder %v134, 0
    %vm147 = vcmp.ne.s32.totalorder %v135, 0
    %vm148 = vcmp.lt.s32.totalorder %v136, 240
    %vm149 = vcmp.lt.s32.totalorder %v137, 240
    %vm150 = vcmp.lt.s32.totalorder %v138, 240
    %vm151 = vcmp.lt.s32.totalorder %v139, 240
    %vm152 = vcmp.ge.s32.totalorder %v136, 16
    %vm153 = vcmp.ge.s32.totalorder %v137, 16
    %vm154 = vcmp.ge.s32.totalorder %v138, 16
    %vm155 = vcmp.ge.s32.totalorder %v139, 16
    %v156 = vsel %vm140, 1, 0
    %v157 = vsel %vm141, 1, 0
    %v158 = vsel %vm142, 1, 0
    %v159 = vsel %vm143, 1, 0
    %vm160 = vcmp.eq.s32.totalorder %v156, 1
    %vm161 = vcmp.eq.s32.totalorder %v157, 1
    %vm162 = vcmp.eq.s32.totalorder %v158, 1
    %vm163 = vcmp.eq.s32.totalorder %v159, 1
    %v164 = vsel %vm160, %v111, 0.0
    %v165 = vsel %vm161, %v112, 0.0
    %v166 = vsel %vm162, %v113, 0.0
    %v167 = vsel %vm163, %v114, 0.0
    %v168 = vsel %vm160, %v115, 0.0
    %v169 = vsel %vm161, %v116, 0.0
    %v170 = vsel %vm162, %v117, 0.0
    %v171 = vsel %vm163, %v118, 0.0
    %v172 = vsel %vm160, %v119, 0.0
    %v173 = vsel %vm161, %v120, 0.0
    %v174 = vsel %vm162, %v121, 0.0
    %v175 = vsel %vm163, %v122, 0.0
    %v176 = vsel %vm160, %v123, 0.0
    %v177 = vsel %vm161, %v124, 0.0
    %v178 = vsel %vm162, %v125, 0.0
    %v179 = vsel %vm163, %v126, 0.0
    %180 = vrot.lane.b32.xlu0 %v164, 1
    %v181 = vpop.permute.xlu0 %180
    %182 = vrot.lane.b32.xlu0 %v168, 1
    %v183 = vpop.permute.xlu0 %182
    %184 = vrot.lane.b32.xlu0 %v172, 1
    %v185 = vpop.permute.xlu0 %184
    %186 = vrot.lane.b32.xlu0 %v176, 1
    %v187 = vpop.permute.xlu0 %186
    %188 = vrot.lane.b32.xlu0 %v165, 1
    %v189 = vpop.permute.xlu0 %188
    %190 = vrot.lane.b32.xlu0 %v169, 1
    %v191 = vpop.permute.xlu0 %190
    %192 = vrot.lane.b32.xlu0 %v173, 1
    %v193 = vpop.permute.xlu0 %192
    %194 = vrot.lane.b32.xlu0 %v177, 1
    %v195 = vpop.permute.xlu0 %194
    %196 = vrot.lane.b32.xlu0 %v166, 1
    %v197 = vpop.permute.xlu0 %196
    %198 = vrot.lane.b32.xlu0 %v170, 1
    %v199 = vpop.permute.xlu0 %198
    %200 = vrot.lane.b32.xlu0 %v174, 1
    %v201 = vpop.permute.xlu0 %200
    %202 = vrot.lane.b32.xlu0 %v178, 1
    %v203 = vpop.permute.xlu0 %202
    %204 = vrot.lane.b32.xlu0 %v167, 1
    %v205 = vpop.permute.xlu0 %204
    %206 = vrot.lane.b32.xlu0 %v171, 1
    %v207 = vpop.permute.xlu0 %206
    %208 = vrot.lane.b32.xlu0 %v175, 1
    %v209 = vpop.permute.xlu0 %208
    %210 = vrot.lane.b32.xlu0 %v179, 1
    %v211 = vpop.permute.xlu0 %210
    %vm212 = vcmp.lt.s32.totalorder %v128, 1
    %v213 = vsel %vm212, %v197, %v205
    %v214 = vsel %vm212, %v199, %v207
    %v215 = vsel %vm212, %v201, %v209
    %v216 = vsel %vm212, %v203, %v211
    %v217 = vsel %vm212, %v189, %v197
    %v218 = vsel %vm212, %v191, %v199
    %v219 = vsel %vm212, %v193, %v201
    %v220 = vsel %vm212, %v195, %v203
    %v221 = vsel %vm212, %v181, %v189
    %v222 = vsel %vm212, %v183, %v191
    %v223 = vsel %vm212, %v185, %v193
    %v224 = vsel %vm212, %v187, %v195
    %v225 = vsel %vm212, %v205, %v181
    %v226 = vsel %vm212, %v207, %v183
    %v227 = vsel %vm212, %v209, %v185
    %v228 = vsel %vm212, %v211, %v187
    %v229 = vsel %vm144, 1, 0
    %v230 = vsel %vm145, 1, 0
    %v231 = vsel %vm146, 1, 0
    %v232 = vsel %vm147, 1, 0
    %vm233 = vcmp.eq.s32.totalorder %v229, 1
    %vm234 = vcmp.eq.s32.totalorder %v230, 1
    %vm235 = vcmp.eq.s32.totalorder %v231, 1
    %vm236 = vcmp.eq.s32.totalorder %v232, 1
    %v237 = vsel %vm233, %v111, 0.0
    %v238 = vsel %vm234, %v112, 0.0
    %v239 = vsel %vm235, %v113, 0.0
    %v240 = vsel %vm236, %v114, 0.0
    %v241 = vsel %vm233, %v115, 0.0
    %v242 = vsel %vm234, %v116, 0.0
    %v243 = vsel %vm235, %v117, 0.0
    %v244 = vsel %vm236, %v118, 0.0
    %v245 = vsel %vm233, %v119, 0.0
    %v246 = vsel %vm234, %v120, 0.0
    %v247 = vsel %vm235, %v121, 0.0
    %v248 = vsel %vm236, %v122, 0.0
    %v249 = vsel %vm233, %v123, 0.0
    %v250 = vsel %vm234, %v124, 0.0
    %v251 = vsel %vm235, %v125, 0.0
    %v252 = vsel %vm236, %v126, 0.0
    %253 = vrot.lane.b32.xlu0 %v237, 127
    %v254 = vpop.permute.xlu0 %253
    %255 = vrot.lane.b32.xlu0 %v241, 127
    %v256 = vpop.permute.xlu0 %255
    %257 = vrot.lane.b32.xlu0 %v245, 127
    %v258 = vpop.permute.xlu0 %257
    %259 = vrot.lane.b32.xlu0 %v249, 127
    %v260 = vpop.permute.xlu0 %259
    %261 = vrot.lane.b32.xlu0 %v238, 127
    %v262 = vpop.permute.xlu0 %261
    %263 = vrot.lane.b32.xlu0 %v242, 127
    %v264 = vpop.permute.xlu0 %263
    %265 = vrot.lane.b32.xlu0 %v246, 127
    %v266 = vpop.permute.xlu0 %265
    %267 = vrot.lane.b32.xlu0 %v250, 127
    %v268 = vpop.permute.xlu0 %267
    %269 = vrot.lane.b32.xlu0 %v239, 127
    %v270 = vpop.permute.xlu0 %269
    %271 = vrot.lane.b32.xlu0 %v243, 127
    %v272 = vpop.permute.xlu0 %271
    %273 = vrot.lane.b32.xlu0 %v247, 127
    %v274 = vpop.permute.xlu0 %273
    %275 = vrot.lane.b32.xlu0 %v251, 127
    %v276 = vpop.permute.xlu0 %275
    %277 = vrot.lane.b32.xlu0 %v240, 127
    %v278 = vpop.permute.xlu0 %277
    %279 = vrot.lane.b32.xlu0 %v244, 127
    %v280 = vpop.permute.xlu0 %279
    %281 = vrot.lane.b32.xlu0 %v248, 127
    %v282 = vpop.permute.xlu0 %281
    %283 = vrot.lane.b32.xlu0 %v252, 127
    %v284 = vpop.permute.xlu0 %283
    %vm285 = vcmp.lt.s32.totalorder %v128, 127
    %v286 = vsel %vm285, %v270, %v278
    %v287 = vsel %vm285, %v272, %v280
    %v288 = vsel %vm285, %v274, %v282
    %v289 = vsel %vm285, %v276, %v284
    %v290 = vsel %vm285, %v262, %v270
    %v291 = vsel %vm285, %v264, %v272
    %v292 = vsel %vm285, %v266, %v274
    %v293 = vsel %vm285, %v268, %v276
    %v294 = vsel %vm285, %v254, %v262
    %v295 = vsel %vm285, %v256, %v264
    %v296 = vsel %vm285, %v258, %v266
    %v297 = vsel %vm285, %v260, %v268
    %v298 = vsel %vm285, %v278, %v254
    %v299 = vsel %vm285, %v280, %v256
    %v300 = vsel %vm285, %v282, %v258
    %v301 = vsel %vm285, %v284, %v260
    %302 = vset.pattern.permute.xlu0 3
    %303 = vperm.xlu0 %302, %v38
    %v304 = vpop.permute.xlu0 %303
    %306 = vset.pattern.permute.xlu0 3
    %307 = vperm.xlu0 %306, %v39
    %v308 = vpop.permute.xlu0 %307
    %310 = vset.pattern.permute.xlu0 3
    %311 = vperm.xlu0 %310, %v40
    %v312 = vpop.permute.xlu0 %311
    %314 = vset.pattern.permute.xlu0 3
    %315 = vperm.xlu0 %314, %v41
    %v316 = vpop.permute.xlu0 %315
    %v318 = vmul.f32 %v225, %v304
    %v319 = vmul.f32 %v221, %v304
    %v320 = vmul.f32 %v217, %v304
    %v321 = vmul.f32 %v213, %v304
    %v322 = vmul.f32 %v226, %v308
    %v323 = vmul.f32 %v222, %v308
    %v324 = vmul.f32 %v218, %v308
    %v325 = vmul.f32 %v214, %v308
    %v326 = vmul.f32 %v227, %v312
    %v327 = vmul.f32 %v223, %v312
    %v328 = vmul.f32 %v219, %v312
    %v329 = vmul.f32 %v215, %v312
    %v330 = vmul.f32 %v228, %v316
    %v331 = vmul.f32 %v224, %v316
    %v332 = vmul.f32 %v220, %v316
    %v333 = vmul.f32 %v216, %v316
    %334 = vset.pattern.permute.xlu0 4
    %335 = vperm.xlu0 %334, %v38
    %v336 = vpop.permute.xlu0 %335
    %338 = vset.pattern.permute.xlu0 4
    %339 = vperm.xlu0 %338, %v39
    %v340 = vpop.permute.xlu0 %339
    %342 = vset.pattern.permute.xlu0 4
    %343 = vperm.xlu0 %342, %v40
    %v344 = vpop.permute.xlu0 %343
    %346 = vset.pattern.permute.xlu0 4
    %347 = vperm.xlu0 %346, %v41
    %v348 = vpop.permute.xlu0 %347
    %v350 = vmul.f32 %v111, %v336
    %v351 = vmul.f32 %v112, %v336
    %v352 = vmul.f32 %v113, %v336
    %v353 = vmul.f32 %v114, %v336
    %v354 = vmul.f32 %v115, %v340
    %v355 = vmul.f32 %v116, %v340
    %v356 = vmul.f32 %v117, %v340
    %v357 = vmul.f32 %v118, %v340
    %v358 = vmul.f32 %v119, %v344
    %v359 = vmul.f32 %v120, %v344
    %v360 = vmul.f32 %v121, %v344
    %v361 = vmul.f32 %v122, %v344
    %v362 = vmul.f32 %v123, %v348
    %v363 = vmul.f32 %v124, %v348
    %v364 = vmul.f32 %v125, %v348
    %v365 = vmul.f32 %v126, %v348
    %v366 = vadd.f32 %v318, %v350
    %v367 = vadd.f32 %v319, %v351
    %v368 = vadd.f32 %v320, %v352
    %v369 = vadd.f32 %v321, %v353
    %v370 = vadd.f32 %v322, %v354
    %v371 = vadd.f32 %v323, %v355
    %v372 = vadd.f32 %v324, %v356
    %v373 = vadd.f32 %v325, %v357
    %v374 = vadd.f32 %v326, %v358
    %v375 = vadd.f32 %v327, %v359
    %v376 = vadd.f32 %v328, %v360
    %v377 = vadd.f32 %v329, %v361
    %v378 = vadd.f32 %v330, %v362
    %v379 = vadd.f32 %v331, %v363
    %v380 = vadd.f32 %v332, %v364
    %v381 = vadd.f32 %v333, %v365
    %382 = vset.pattern.permute.xlu0 5
    %383 = vperm.xlu0 %382, %v38
    %v384 = vpop.permute.xlu0 %383
    %386 = vset.pattern.permute.xlu0 5
    %387 = vperm.xlu0 %386, %v39
    %v388 = vpop.permute.xlu0 %387
    %390 = vset.pattern.permute.xlu0 5
    %391 = vperm.xlu0 %390, %v40
    %v392 = vpop.permute.xlu0 %391
    %394 = vset.pattern.permute.xlu0 5
    %395 = vperm.xlu0 %394, %v41
    %v396 = vpop.permute.xlu0 %395
    %v398 = vmul.f32 %v294, %v384
    %v399 = vmul.f32 %v290, %v384
    %v400 = vmul.f32 %v286, %v384
    %v401 = vmul.f32 %v298, %v384
    %v402 = vmul.f32 %v295, %v388
    %v403 = vmul.f32 %v291, %v388
    %v404 = vmul.f32 %v287, %v388
    %v405 = vmul.f32 %v299, %v388
    %v406 = vmul.f32 %v296, %v392
    %v407 = vmul.f32 %v292, %v392
    %v408 = vmul.f32 %v288, %v392
    %v409 = vmul.f32 %v300, %v392
    %v410 = vmul.f32 %v297, %v396
    %v411 = vmul.f32 %v293, %v396
    %v412 = vmul.f32 %v289, %v396
    %v413 = vmul.f32 %v301, %v396
    %v414 = vadd.f32 %v366, %v398
    %v415 = vadd.f32 %v367, %v399
    %v416 = vadd.f32 %v368, %v400
    %v417 = vadd.f32 %v369, %v401
    %v418 = vadd.f32 %v370, %v402
    %v419 = vadd.f32 %v371, %v403
    %v420 = vadd.f32 %v372, %v404
    %v421 = vadd.f32 %v373, %v405
    %v422 = vadd.f32 %v374, %v406
    %v423 = vadd.f32 %v375, %v407
    %v424 = vadd.f32 %v376, %v408
    %v425 = vadd.f32 %v377, %v409
    %v426 = vadd.f32 %v378, %v410
    %v427 = vadd.f32 %v379, %v411
    %v428 = vadd.f32 %v380, %v412
    %v429 = vadd.f32 %v381, %v413
    %430 = vset.pattern.permute.xlu0 0
    %431 = vperm.xlu0 %430, %v38
    %v432 = vpop.permute.xlu0 %431
    %434 = vset.pattern.permute.xlu0 0
    %435 = vperm.xlu0 %434, %v39
    %v436 = vpop.permute.xlu0 %435
    %438 = vset.pattern.permute.xlu0 0
    %439 = vperm.xlu0 %438, %v40
    %v440 = vpop.permute.xlu0 %439
    %442 = vset.pattern.permute.xlu0 0
    %443 = vperm.xlu0 %442, %v41
    %v444 = vpop.permute.xlu0 %443
    %v446 = vmul.f32 %v225, %v432
    %v447 = vmul.f32 %v221, %v432
    %v448 = vmul.f32 %v217, %v432
    %v449 = vmul.f32 %v213, %v432
    %v450 = vmul.f32 %v226, %v436
    %v451 = vmul.f32 %v222, %v436
    %v452 = vmul.f32 %v218, %v436
    %v453 = vmul.f32 %v214, %v436
    %v454 = vmul.f32 %v227, %v440
    %v455 = vmul.f32 %v223, %v440
    %v456 = vmul.f32 %v219, %v440
    %v457 = vmul.f32 %v215, %v440
    %v458 = vmul.f32 %v228, %v444
    %v459 = vmul.f32 %v224, %v444
    %v460 = vmul.f32 %v220, %v444
    %v461 = vmul.f32 %v216, %v444
    %462 = vset.pattern.permute.xlu0 1
    %463 = vperm.xlu0 %462, %v38
    %v464 = vpop.permute.xlu0 %463
    %466 = vset.pattern.permute.xlu0 1
    %467 = vperm.xlu0 %466, %v39
    %v468 = vpop.permute.xlu0 %467
    %470 = vset.pattern.permute.xlu0 1
    %471 = vperm.xlu0 %470, %v40
    %v472 = vpop.permute.xlu0 %471
    %474 = vset.pattern.permute.xlu0 1
    %475 = vperm.xlu0 %474, %v41
    %v476 = vpop.permute.xlu0 %475
    %v478 = vmul.f32 %v111, %v464
    %v479 = vmul.f32 %v112, %v464
    %v480 = vmul.f32 %v113, %v464
    %v481 = vmul.f32 %v114, %v464
    %v482 = vmul.f32 %v115, %v468
    %v483 = vmul.f32 %v116, %v468
    %v484 = vmul.f32 %v117, %v468
    %v485 = vmul.f32 %v118, %v468
    %v486 = vmul.f32 %v119, %v472
    %v487 = vmul.f32 %v120, %v472
    %v488 = vmul.f32 %v121, %v472
    %v489 = vmul.f32 %v122, %v472
    %v490 = vmul.f32 %v123, %v476
    %v491 = vmul.f32 %v124, %v476
    %v492 = vmul.f32 %v125, %v476
    %v493 = vmul.f32 %v126, %v476
    %v494 = vadd.f32 %v446, %v478
    %v495 = vadd.f32 %v447, %v479
    %v496 = vadd.f32 %v448, %v480
    %v497 = vadd.f32 %v449, %v481
    %v498 = vadd.f32 %v450, %v482
    %v499 = vadd.f32 %v451, %v483
    %v500 = vadd.f32 %v452, %v484
    %v501 = vadd.f32 %v453, %v485
    %v502 = vadd.f32 %v454, %v486
    %v503 = vadd.f32 %v455, %v487
    %v504 = vadd.f32 %v456, %v488
    %v505 = vadd.f32 %v457, %v489
    %v506 = vadd.f32 %v458, %v490
    %v507 = vadd.f32 %v459, %v491
    %v508 = vadd.f32 %v460, %v492
    %v509 = vadd.f32 %v461, %v493
    %510 = vset.pattern.permute.xlu0 2
    %511 = vperm.xlu0 %510, %v38
    %v512 = vpop.permute.xlu0 %511
    %514 = vset.pattern.permute.xlu0 2
    %515 = vperm.xlu0 %514, %v39
    %v516 = vpop.permute.xlu0 %515
    %518 = vset.pattern.permute.xlu0 2
    %519 = vperm.xlu0 %518, %v40
    %v520 = vpop.permute.xlu0 %519
    %522 = vset.pattern.permute.xlu0 2
    %523 = vperm.xlu0 %522, %v41
    %v524 = vpop.permute.xlu0 %523
    %v526 = vmul.f32 %v294, %v512
    %v527 = vmul.f32 %v290, %v512
    %v528 = vmul.f32 %v286, %v512
    %v529 = vmul.f32 %v298, %v512
    %v530 = vmul.f32 %v295, %v516
    %v531 = vmul.f32 %v291, %v516
    %v532 = vmul.f32 %v287, %v516
    %v533 = vmul.f32 %v299, %v516
    %v534 = vmul.f32 %v296, %v520
    %v535 = vmul.f32 %v292, %v520
    %v536 = vmul.f32 %v288, %v520
    %v537 = vmul.f32 %v300, %v520
    %v538 = vmul.f32 %v297, %v524
    %v539 = vmul.f32 %v293, %v524
    %v540 = vmul.f32 %v289, %v524
    %v541 = vmul.f32 %v301, %v524
    %v542 = vadd.f32 %v494, %v526
    %v543 = vadd.f32 %v495, %v527
    %v544 = vadd.f32 %v496, %v528
    %v545 = vadd.f32 %v497, %v529
    %v546 = vadd.f32 %v498, %v530
    %v547 = vadd.f32 %v499, %v531
    %v548 = vadd.f32 %v500, %v532
    %v549 = vadd.f32 %v501, %v533
    %v550 = vadd.f32 %v502, %v534
    %v551 = vadd.f32 %v503, %v535
    %v552 = vadd.f32 %v504, %v536
    %v553 = vadd.f32 %v505, %v537
    %v554 = vadd.f32 %v506, %v538
    %v555 = vadd.f32 %v507, %v539
    %v556 = vadd.f32 %v508, %v540
    %v557 = vadd.f32 %v509, %v541
    %v558 = vsel %vm148, 1, 0
    %v559 = vsel %vm149, 1, 0
    %v560 = vsel %vm150, 1, 0
    %v561 = vsel %vm151, 1, 0
    %vm562 = vcmp.eq.s32.totalorder %v558, 1
    %vm563 = vcmp.eq.s32.totalorder %v559, 1
    %vm564 = vcmp.eq.s32.totalorder %v560, 1
    %vm565 = vcmp.eq.s32.totalorder %v561, 1
    %v566 = vsel %vm562, %v542, 0.0
    %v567 = vsel %vm563, %v543, 0.0
    %v568 = vsel %vm564, %v544, 0.0
    %v569 = vsel %vm565, %v545, 0.0
    %v570 = vsel %vm562, %v546, 0.0
    %v571 = vsel %vm563, %v547, 0.0
    %v572 = vsel %vm564, %v548, 0.0
    %v573 = vsel %vm565, %v549, 0.0
    %v574 = vsel %vm562, %v550, 0.0
    %v575 = vsel %vm563, %v551, 0.0
    %v576 = vsel %vm564, %v552, 0.0
    %v577 = vsel %vm565, %v553, 0.0
    %v578 = vsel %vm562, %v554, 0.0
    %v579 = vsel %vm563, %v555, 0.0
    %v580 = vsel %vm564, %v556, 0.0
    %v581 = vsel %vm565, %v557, 0.0
    %582 = vrot.lane.b32.xlu0 %v566, 16
    %v583 = vpop.permute.xlu0 %582
    %584 = vrot.lane.b32.xlu0 %v570, 16
    %v585 = vpop.permute.xlu0 %584
    %586 = vrot.lane.b32.xlu0 %v574, 16
    %v587 = vpop.permute.xlu0 %586
    %588 = vrot.lane.b32.xlu0 %v578, 16
    %v589 = vpop.permute.xlu0 %588
    %590 = vrot.lane.b32.xlu0 %v567, 16
    %v591 = vpop.permute.xlu0 %590
    %592 = vrot.lane.b32.xlu0 %v571, 16
    %v593 = vpop.permute.xlu0 %592
    %594 = vrot.lane.b32.xlu0 %v575, 16
    %v595 = vpop.permute.xlu0 %594
    %596 = vrot.lane.b32.xlu0 %v579, 16
    %v597 = vpop.permute.xlu0 %596
    %598 = vrot.lane.b32.xlu0 %v568, 16
    %v599 = vpop.permute.xlu0 %598
    %600 = vrot.lane.b32.xlu0 %v572, 16
    %v601 = vpop.permute.xlu0 %600
    %602 = vrot.lane.b32.xlu0 %v576, 16
    %v603 = vpop.permute.xlu0 %602
    %604 = vrot.lane.b32.xlu0 %v580, 16
    %v605 = vpop.permute.xlu0 %604
    %606 = vrot.lane.b32.xlu0 %v569, 16
    %v607 = vpop.permute.xlu0 %606
    %608 = vrot.lane.b32.xlu0 %v573, 16
    %v609 = vpop.permute.xlu0 %608
    %610 = vrot.lane.b32.xlu0 %v577, 16
    %v611 = vpop.permute.xlu0 %610
    %612 = vrot.lane.b32.xlu0 %v581, 16
    %v613 = vpop.permute.xlu0 %612
    %vm614 = vcmp.lt.s32.totalorder %v128, 16
    %v615 = vsel %vm614, %v599, %v607
    %v616 = vsel %vm614, %v601, %v609
    %v617 = vsel %vm614, %v603, %v611
    %v618 = vsel %vm614, %v605, %v613
    %v619 = vsel %vm614, %v591, %v599
    %v620 = vsel %vm614, %v593, %v601
    %v621 = vsel %vm614, %v595, %v603
    %v622 = vsel %vm614, %v597, %v605
    %v623 = vsel %vm614, %v583, %v591
    %v624 = vsel %vm614, %v585, %v593
    %v625 = vsel %vm614, %v587, %v595
    %v626 = vsel %vm614, %v589, %v597
    %v627 = vsel %vm614, %v607, %v583
    %v628 = vsel %vm614, %v609, %v585
    %v629 = vsel %vm614, %v611, %v587
    %v630 = vsel %vm614, %v613, %v589
    %v631 = vadd.f32 %v414, %v627
    %v632 = vadd.f32 %v415, %v623
    %v633 = vadd.f32 %v416, %v619
    %v634 = vadd.f32 %v417, %v615
    %v635 = vadd.f32 %v418, %v628
    %v636 = vadd.f32 %v419, %v624
    %v637 = vadd.f32 %v420, %v620
    %v638 = vadd.f32 %v421, %v616
    %v639 = vadd.f32 %v422, %v629
    %v640 = vadd.f32 %v423, %v625
    %v641 = vadd.f32 %v424, %v621
    %v642 = vadd.f32 %v425, %v617
    %v643 = vadd.f32 %v426, %v630
    %v644 = vadd.f32 %v427, %v626
    %v645 = vadd.f32 %v428, %v622
    %v646 = vadd.f32 %v429, %v618
    %647 = vset.pattern.permute.xlu0 6
    %648 = vperm.xlu0 %647, %v38
    %v649 = vpop.permute.xlu0 %648
    %651 = vset.pattern.permute.xlu0 6
    %652 = vperm.xlu0 %651, %v39
    %v653 = vpop.permute.xlu0 %652
    %655 = vset.pattern.permute.xlu0 6
    %656 = vperm.xlu0 %655, %v40
    %v657 = vpop.permute.xlu0 %656
    %659 = vset.pattern.permute.xlu0 6
    %660 = vperm.xlu0 %659, %v41
    %v661 = vpop.permute.xlu0 %660
    %v663 = vmul.f32 %v225, %v649
    %v664 = vmul.f32 %v221, %v649
    %v665 = vmul.f32 %v217, %v649
    %v666 = vmul.f32 %v213, %v649
    %v667 = vmul.f32 %v226, %v653
    %v668 = vmul.f32 %v222, %v653
    %v669 = vmul.f32 %v218, %v653
    %v670 = vmul.f32 %v214, %v653
    %v671 = vmul.f32 %v227, %v657
    %v672 = vmul.f32 %v223, %v657
    %v673 = vmul.f32 %v219, %v657
    %v674 = vmul.f32 %v215, %v657
    %v675 = vmul.f32 %v228, %v661
    %v676 = vmul.f32 %v224, %v661
    %v677 = vmul.f32 %v220, %v661
    %v678 = vmul.f32 %v216, %v661
    %679 = vset.pattern.permute.xlu0 7
    %680 = vperm.xlu0 %679, %v38
    %v681 = vpop.permute.xlu0 %680
    %683 = vset.pattern.permute.xlu0 7
    %684 = vperm.xlu0 %683, %v39
    %v685 = vpop.permute.xlu0 %684
    %687 = vset.pattern.permute.xlu0 7
    %688 = vperm.xlu0 %687, %v40
    %v689 = vpop.permute.xlu0 %688
    %691 = vset.pattern.permute.xlu0 7
    %692 = vperm.xlu0 %691, %v41
    %v693 = vpop.permute.xlu0 %692
    %v695 = vmul.f32 %v111, %v681
    %v696 = vmul.f32 %v112, %v681
    %v697 = vmul.f32 %v113, %v681
    %v698 = vmul.f32 %v114, %v681
    %v699 = vmul.f32 %v115, %v685
    %v700 = vmul.f32 %v116, %v685
    %v701 = vmul.f32 %v117, %v685
    %v702 = vmul.f32 %v118, %v685
    %v703 = vmul.f32 %v119, %v689
    %v704 = vmul.f32 %v120, %v689
    %v705 = vmul.f32 %v121, %v689
    %v706 = vmul.f32 %v122, %v689
    %v707 = vmul.f32 %v123, %v693
    %v708 = vmul.f32 %v124, %v693
    %v709 = vmul.f32 %v125, %v693
    %v710 = vmul.f32 %v126, %v693
    %v711 = vadd.f32 %v663, %v695
    %v712 = vadd.f32 %v664, %v696
    %v713 = vadd.f32 %v665, %v697
    %v714 = vadd.f32 %v666, %v698
    %v715 = vadd.f32 %v667, %v699
    %v716 = vadd.f32 %v668, %v700
    %v717 = vadd.f32 %v669, %v701
    %v718 = vadd.f32 %v670, %v702
    %v719 = vadd.f32 %v671, %v703
    %v720 = vadd.f32 %v672, %v704
    %v721 = vadd.f32 %v673, %v705
    %v722 = vadd.f32 %v674, %v706
    %v723 = vadd.f32 %v675, %v707
    %v724 = vadd.f32 %v676, %v708
    %v725 = vadd.f32 %v677, %v709
    %v726 = vadd.f32 %v678, %v710
    %727 = vset.pattern.permute.xlu0 8
    %728 = vperm.xlu0 %727, %v38
    %v729 = vpop.permute.xlu0 %728
    %731 = vset.pattern.permute.xlu0 8
    %732 = vperm.xlu0 %731, %v39
    %v733 = vpop.permute.xlu0 %732
    %735 = vset.pattern.permute.xlu0 8
    %736 = vperm.xlu0 %735, %v40
    %v737 = vpop.permute.xlu0 %736
    %739 = vset.pattern.permute.xlu0 8
    %740 = vperm.xlu0 %739, %v41
    %v741 = vpop.permute.xlu0 %740
    %v743 = vmul.f32 %v294, %v729
    %v744 = vmul.f32 %v290, %v729
    %v745 = vmul.f32 %v286, %v729
    %v746 = vmul.f32 %v298, %v729
    %v747 = vmul.f32 %v295, %v733
    %v748 = vmul.f32 %v291, %v733
    %v749 = vmul.f32 %v287, %v733
    %v750 = vmul.f32 %v299, %v733
    %v751 = vmul.f32 %v296, %v737
    %v752 = vmul.f32 %v292, %v737
    %v753 = vmul.f32 %v288, %v737
    %v754 = vmul.f32 %v300, %v737
    %v755 = vmul.f32 %v297, %v741
    %v756 = vmul.f32 %v293, %v741
    %v757 = vmul.f32 %v289, %v741
    %v758 = vmul.f32 %v301, %v741
    %v759 = vadd.f32 %v711, %v743
    %v760 = vadd.f32 %v712, %v744
    %v761 = vadd.f32 %v713, %v745
    %v762 = vadd.f32 %v714, %v746
    %v763 = vadd.f32 %v715, %v747
    %v764 = vadd.f32 %v716, %v748
    %v765 = vadd.f32 %v717, %v749
    %v766 = vadd.f32 %v718, %v750
    %v767 = vadd.f32 %v719, %v751
    %v768 = vadd.f32 %v720, %v752
    %v769 = vadd.f32 %v721, %v753
    %v770 = vadd.f32 %v722, %v754
    %v771 = vadd.f32 %v723, %v755
    %v772 = vadd.f32 %v724, %v756
    %v773 = vadd.f32 %v725, %v757
    %v774 = vadd.f32 %v726, %v758
    %v775 = vsel %vm152, 1, 0
    %v776 = vsel %vm153, 1, 0
    %v777 = vsel %vm154, 1, 0
    %v778 = vsel %vm155, 1, 0
    %vm779 = vcmp.eq.s32.totalorder %v775, 1
    %vm780 = vcmp.eq.s32.totalorder %v776, 1
    %vm781 = vcmp.eq.s32.totalorder %v777, 1
    %vm782 = vcmp.eq.s32.totalorder %v778, 1
    %v783 = vsel %vm779, %v759, 0.0
    %v784 = vsel %vm780, %v760, 0.0
    %v785 = vsel %vm781, %v761, 0.0
    %v786 = vsel %vm782, %v762, 0.0
    %v787 = vsel %vm779, %v763, 0.0
    %v788 = vsel %vm780, %v764, 0.0
    %v789 = vsel %vm781, %v765, 0.0
    %v790 = vsel %vm782, %v766, 0.0
    %v791 = vsel %vm779, %v767, 0.0
    %v792 = vsel %vm780, %v768, 0.0
    %v793 = vsel %vm781, %v769, 0.0
    %v794 = vsel %vm782, %v770, 0.0
    %v795 = vsel %vm779, %v771, 0.0
    %v796 = vsel %vm780, %v772, 0.0
    %v797 = vsel %vm781, %v773, 0.0
    %v798 = vsel %vm782, %v774, 0.0
    %799 = vrot.lane.b32.xlu0 %v783, 112
    %v800 = vpop.permute.xlu0 %799
    %801 = vrot.lane.b32.xlu0 %v787, 112
    %v802 = vpop.permute.xlu0 %801
    %803 = vrot.lane.b32.xlu0 %v791, 112
    %v804 = vpop.permute.xlu0 %803
    %805 = vrot.lane.b32.xlu0 %v795, 112
    %v806 = vpop.permute.xlu0 %805
    %807 = vrot.lane.b32.xlu0 %v784, 112
    %v808 = vpop.permute.xlu0 %807
    %809 = vrot.lane.b32.xlu0 %v788, 112
    %v810 = vpop.permute.xlu0 %809
    %811 = vrot.lane.b32.xlu0 %v792, 112
    %v812 = vpop.permute.xlu0 %811
    %813 = vrot.lane.b32.xlu0 %v796, 112
    %v814 = vpop.permute.xlu0 %813
    %815 = vrot.lane.b32.xlu0 %v785, 112
    %v816 = vpop.permute.xlu0 %815
    %817 = vrot.lane.b32.xlu0 %v789, 112
    %v818 = vpop.permute.xlu0 %817
    %819 = vrot.lane.b32.xlu0 %v793, 112
    %v820 = vpop.permute.xlu0 %819
    %821 = vrot.lane.b32.xlu0 %v797, 112
    %v822 = vpop.permute.xlu0 %821
    %823 = vrot.lane.b32.xlu0 %v786, 112
    %v824 = vpop.permute.xlu0 %823
    %825 = vrot.lane.b32.xlu0 %v790, 112
    %v826 = vpop.permute.xlu0 %825
    %827 = vrot.lane.b32.xlu0 %v794, 112
    %v828 = vpop.permute.xlu0 %827
    %829 = vrot.lane.b32.xlu0 %v798, 112
    %v830 = vpop.permute.xlu0 %829
    %vm831 = vcmp.lt.s32.totalorder %v128, 112
    %v832 = vsel %vm831, %v816, %v824
    %v833 = vsel %vm831, %v818, %v826
    %v834 = vsel %vm831, %v820, %v828
    %v835 = vsel %vm831, %v822, %v830
    %v836 = vsel %vm831, %v808, %v816
    %v837 = vsel %vm831, %v810, %v818
    %v838 = vsel %vm831, %v812, %v820
    %v839 = vsel %vm831, %v814, %v822
    %v840 = vsel %vm831, %v800, %v808
    %v841 = vsel %vm831, %v802, %v810
    %v842 = vsel %vm831, %v804, %v812
    %v843 = vsel %vm831, %v806, %v814
    %v844 = vsel %vm831, %v824, %v800
    %v845 = vsel %vm831, %v826, %v802
    %v846 = vsel %vm831, %v828, %v804
    %v847 = vsel %vm831, %v830, %v806
    %v848 = vadd.f32 %v631, %v840
    %v849 = vadd.f32 %v632, %v836
    %v850 = vadd.f32 %v633, %v832
    %v851 = vadd.f32 %v634, %v844
    %v852 = vadd.f32 %v635, %v841
    %v853 = vadd.f32 %v636, %v837
    %v854 = vadd.f32 %v637, %v833
    %v855 = vadd.f32 %v638, %v845
    %v856 = vadd.f32 %v639, %v842
    %v857 = vadd.f32 %v640, %v838
    %v858 = vadd.f32 %v641, %v834
    %v859 = vadd.f32 %v642, %v846
    %v860 = vadd.f32 %v643, %v843
    %v861 = vadd.f32 %v644, %v839
    %v862 = vadd.f32 %v645, %v835
    %v863 = vadd.f32 %v646, %v847
    %864 = vset.pattern.permute.xlu0 11
    %865 = vperm.xlu0 %864, %v38
    %v866 = vpop.permute.xlu0 %865
    %868 = vset.pattern.permute.xlu0 11
    %869 = vperm.xlu0 %868, %v39
    %v870 = vpop.permute.xlu0 %869
    %872 = vset.pattern.permute.xlu0 11
    %873 = vperm.xlu0 %872, %v40
    %v874 = vpop.permute.xlu0 %873
    %876 = vset.pattern.permute.xlu0 11
    %877 = vperm.xlu0 %876, %v41
    %v878 = vpop.permute.xlu0 %877
    %v880 = vadd.f32 %v848, %v866
    %v881 = vadd.f32 %v849, %v866
    %v882 = vadd.f32 %v850, %v866
    %v883 = vadd.f32 %v851, %v866
    %v884 = vadd.f32 %v852, %v870
    %v885 = vadd.f32 %v853, %v870
    %v886 = vadd.f32 %v854, %v870
    %v887 = vadd.f32 %v855, %v870
    %v888 = vadd.f32 %v856, %v874
    %v889 = vadd.f32 %v857, %v874
    %v890 = vadd.f32 %v858, %v874
    %v891 = vadd.f32 %v859, %v874
    %v892 = vadd.f32 %v860, %v878
    %v893 = vadd.f32 %v861, %v878
    %v894 = vadd.f32 %v862, %v878
    %v895 = vadd.f32 %v863, %v878
    %v896 = vmul.f32 %v880, 0.5
    %v897 = vmul.f32 %v881, 0.5
    %v898 = vmul.f32 %v882, 0.5
    %v899 = vmul.f32 %v883, 0.5
    %v900 = vmul.f32 %v884, 0.5
    %v901 = vmul.f32 %v885, 0.5
    %v902 = vmul.f32 %v886, 0.5
    %v903 = vmul.f32 %v887, 0.5
    %v904 = vmul.f32 %v888, 0.5
    %v905 = vmul.f32 %v889, 0.5
    %v906 = vmul.f32 %v890, 0.5
    %v907 = vmul.f32 %v891, 0.5
    %v908 = vmul.f32 %v892, 0.5
    %v909 = vmul.f32 %v893, 0.5
    %v910 = vmul.f32 %v894, 0.5
    %v911 = vmul.f32 %v895, 0.5
    %v912 = vmul.f32 %v880, 0.70710677
    %v913 = vmul.f32 %v881, 0.70710677
    %v914 = vmul.f32 %v882, 0.70710677
    %v915 = vmul.f32 %v883, 0.70710677
    %v916 = vmul.f32 %v884, 0.70710677
    %v917 = vmul.f32 %v885, 0.70710677
    %v918 = vmul.f32 %v886, 0.70710677
    %v919 = vmul.f32 %v887, 0.70710677
    %v920 = vmul.f32 %v888, 0.70710677
    %v921 = vmul.f32 %v889, 0.70710677
    %v922 = vmul.f32 %v890, 0.70710677
    %v923 = vmul.f32 %v891, 0.70710677
    %v924 = vmul.f32 %v892, 0.70710677
    %v925 = vmul.f32 %v893, 0.70710677
    %v926 = vmul.f32 %v894, 0.70710677
    %v927 = vmul.f32 %v895, 0.70710677
    %v928 = vmax.f32 %v912, -4.0
    %v929 = vmax.f32 %v913, -4.0
    %v930 = vmax.f32 %v914, -4.0
    %v931 = vmax.f32 %v915, -4.0
    %v932 = vmax.f32 %v916, -4.0
    %v933 = vmax.f32 %v917, -4.0
    %v934 = vmax.f32 %v918, -4.0
    %v935 = vmax.f32 %v919, -4.0
    %v936 = vmax.f32 %v920, -4.0
    %v937 = vmax.f32 %v921, -4.0
    %v938 = vmax.f32 %v922, -4.0
    %v939 = vmax.f32 %v923, -4.0
    %v940 = vmax.f32 %v924, -4.0
    %v941 = vmax.f32 %v925, -4.0
    %v942 = vmax.f32 %v926, -4.0
    %v943 = vmax.f32 %v927, -4.0
    %v944 = vmin.f32 %v928, 4.0
    %v945 = vmin.f32 %v929, 4.0
    %v946 = vmin.f32 %v930, 4.0
    %v947 = vmin.f32 %v931, 4.0
    %v948 = vmin.f32 %v932, 4.0
    %v949 = vmin.f32 %v933, 4.0
    %v950 = vmin.f32 %v934, 4.0
    %v951 = vmin.f32 %v935, 4.0
    %v952 = vmin.f32 %v936, 4.0
    %v953 = vmin.f32 %v937, 4.0
    %v954 = vmin.f32 %v938, 4.0
    %v955 = vmin.f32 %v939, 4.0
    %v956 = vmin.f32 %v940, 4.0
    %v957 = vmin.f32 %v941, 4.0
    %v958 = vmin.f32 %v942, 4.0
    %v959 = vmin.f32 %v943, 4.0
    %v960 = vmul.f32 %v944, %v944
    %v961 = vmul.f32 %v945, %v945
    %v962 = vmul.f32 %v946, %v946
    %v963 = vmul.f32 %v947, %v947
    %v964 = vmul.f32 %v948, %v948
    %v965 = vmul.f32 %v949, %v949
    %v966 = vmul.f32 %v950, %v950
    %v967 = vmul.f32 %v951, %v951
    %v968 = vmul.f32 %v952, %v952
    %v969 = vmul.f32 %v953, %v953
    %v970 = vmul.f32 %v954, %v954
    %v971 = vmul.f32 %v955, %v955
    %v972 = vmul.f32 %v956, %v956
    %v973 = vmul.f32 %v957, %v957
    %v974 = vmul.f32 %v958, %v958
    %v975 = vmul.f32 %v959, %v959
    %v976 = vmul.f32 %v960, -2.7261424e-10
    %v977 = vmul.f32 %v961, -2.7261424e-10
    %v978 = vmul.f32 %v962, -2.7261424e-10
    %v979 = vmul.f32 %v963, -2.7261424e-10
    %v980 = vmul.f32 %v964, -2.7261424e-10
    %v981 = vmul.f32 %v965, -2.7261424e-10
    %v982 = vmul.f32 %v966, -2.7261424e-10
    %v983 = vmul.f32 %v967, -2.7261424e-10
    %v984 = vmul.f32 %v968, -2.7261424e-10
    %v985 = vmul.f32 %v969, -2.7261424e-10
    %v986 = vmul.f32 %v970, -2.7261424e-10
    %v987 = vmul.f32 %v971, -2.7261424e-10
    %v988 = vmul.f32 %v972, -2.7261424e-10
    %v989 = vmul.f32 %v973, -2.7261424e-10
    %v990 = vmul.f32 %v974, -2.7261424e-10
    %v991 = vmul.f32 %v975, -2.7261424e-10
    %v992 = vadd.f32 %v976, 2.7706815e-08
    %v993 = vadd.f32 %v977, 2.7706815e-08
    %v994 = vadd.f32 %v978, 2.7706815e-08
    %v995 = vadd.f32 %v979, 2.7706815e-08
    %v996 = vadd.f32 %v980, 2.7706815e-08
    %v997 = vadd.f32 %v981, 2.7706815e-08
    %v998 = vadd.f32 %v982, 2.7706815e-08
    %v999 = vadd.f32 %v983, 2.7706815e-08
    %v1000 = vadd.f32 %v984, 2.7706815e-08
    %v1001 = vadd.f32 %v985, 2.7706815e-08
    %v1002 = vadd.f32 %v986, 2.7706815e-08
    %v1003 = vadd.f32 %v987, 2.7706815e-08
    %v1004 = vadd.f32 %v988, 2.7706815e-08
    %v1005 = vadd.f32 %v989, 2.7706815e-08
    %v1006 = vadd.f32 %v990, 2.7706815e-08
    %v1007 = vadd.f32 %v991, 2.7706815e-08
    %v1008 = vmul.f32 %v960, %v992
    %v1009 = vmul.f32 %v961, %v993
    %v1010 = vmul.f32 %v962, %v994
    %v1011 = vmul.f32 %v963, %v995
    %v1012 = vmul.f32 %v964, %v996
    %v1013 = vmul.f32 %v965, %v997
    %v1014 = vmul.f32 %v966, %v998
    %v1015 = vmul.f32 %v967, %v999
    %v1016 = vmul.f32 %v968, %v1000
    %v1017 = vmul.f32 %v969, %v1001
    %v1018 = vmul.f32 %v970, %v1002
    %v1019 = vmul.f32 %v971, %v1003
    %v1020 = vmul.f32 %v972, %v1004
    %v1021 = vmul.f32 %v973, %v1005
    %v1022 = vmul.f32 %v974, %v1006
    %v1023 = vmul.f32 %v975, %v1007
    %v1024 = vadd.f32 %v1008, -2.101024e-06
    %v1025 = vadd.f32 %v1009, -2.101024e-06
    %v1026 = vadd.f32 %v1010, -2.101024e-06
    %v1027 = vadd.f32 %v1011, -2.101024e-06
    %v1028 = vadd.f32 %v1012, -2.101024e-06
    %v1029 = vadd.f32 %v1013, -2.101024e-06
    %v1030 = vadd.f32 %v1014, -2.101024e-06
    %v1031 = vadd.f32 %v1015, -2.101024e-06
    %v1032 = vadd.f32 %v1016, -2.101024e-06
    %v1033 = vadd.f32 %v1017, -2.101024e-06
    %v1034 = vadd.f32 %v1018, -2.101024e-06
    %v1035 = vadd.f32 %v1019, -2.101024e-06
    %v1036 = vadd.f32 %v1020, -2.101024e-06
    %v1037 = vadd.f32 %v1021, -2.101024e-06
    %v1038 = vadd.f32 %v1022, -2.101024e-06
    %v1039 = vadd.f32 %v1023, -2.101024e-06
    %v1040 = vmul.f32 %v960, %v1024
    %v1041 = vmul.f32 %v961, %v1025
    %v1042 = vmul.f32 %v962, %v1026
    %v1043 = vmul.f32 %v963, %v1027
    %v1044 = vmul.f32 %v964, %v1028
    %v1045 = vmul.f32 %v965, %v1029
    %v1046 = vmul.f32 %v966, %v1030
    %v1047 = vmul.f32 %v967, %v1031
    %v1048 = vmul.f32 %v968, %v1032
    %v1049 = vmul.f32 %v969, %v1033
    %v1050 = vmul.f32 %v970, %v1034
    %v1051 = vmul.f32 %v971, %v1035
    %v1052 = vmul.f32 %v972, %v1036
    %v1053 = vmul.f32 %v973, %v1037
    %v1054 = vmul.f32 %v974, %v1038
    %v1055 = vmul.f32 %v975, %v1039
    %v1056 = vadd.f32 %v1040, -5.6925062e-05
    %v1057 = vadd.f32 %v1041, -5.6925062e-05
    %v1058 = vadd.f32 %v1042, -5.6925062e-05
    %v1059 = vadd.f32 %v1043, -5.6925062e-05
    %v1060 = vadd.f32 %v1044, -5.6925062e-05
    %v1061 = vadd.f32 %v1045, -5.6925062e-05
    %v1062 = vadd.f32 %v1046, -5.6925062e-05
    %v1063 = vadd.f32 %v1047, -5.6925062e-05
    %v1064 = vadd.f32 %v1048, -5.6925062e-05
    %v1065 = vadd.f32 %v1049, -5.6925062e-05
    %v1066 = vadd.f32 %v1050, -5.6925062e-05
    %v1067 = vadd.f32 %v1051, -5.6925062e-05
    %v1068 = vadd.f32 %v1052, -5.6925062e-05
    %v1069 = vadd.f32 %v1053, -5.6925062e-05
    %v1070 = vadd.f32 %v1054, -5.6925062e-05
    %v1071 = vadd.f32 %v1055, -5.6925062e-05
    %v1072 = vmul.f32 %v960, %v1056
    %v1073 = vmul.f32 %v961, %v1057
    %v1074 = vmul.f32 %v962, %v1058
    %v1075 = vmul.f32 %v963, %v1059
    %v1076 = vmul.f32 %v964, %v1060
    %v1077 = vmul.f32 %v965, %v1061
    %v1078 = vmul.f32 %v966, %v1062
    %v1079 = vmul.f32 %v967, %v1063
    %v1080 = vmul.f32 %v968, %v1064
    %v1081 = vmul.f32 %v969, %v1065
    %v1082 = vmul.f32 %v970, %v1066
    %v1083 = vmul.f32 %v971, %v1067
    %v1084 = vmul.f32 %v972, %v1068
    %v1085 = vmul.f32 %v973, %v1069
    %v1086 = vmul.f32 %v974, %v1070
    %v1087 = vmul.f32 %v975, %v1071
    %v1088 = vadd.f32 %v1072, -0.00073499064
    %v1089 = vadd.f32 %v1073, -0.00073499064
    %v1090 = vadd.f32 %v1074, -0.00073499064
    %v1091 = vadd.f32 %v1075, -0.00073499064
    %v1092 = vadd.f32 %v1076, -0.00073499064
    %v1093 = vadd.f32 %v1077, -0.00073499064
    %v1094 = vadd.f32 %v1078, -0.00073499064
    %v1095 = vadd.f32 %v1079, -0.00073499064
    %v1096 = vadd.f32 %v1080, -0.00073499064
    %v1097 = vadd.f32 %v1081, -0.00073499064
    %v1098 = vadd.f32 %v1082, -0.00073499064
    %v1099 = vadd.f32 %v1083, -0.00073499064
    %v1100 = vadd.f32 %v1084, -0.00073499064
    %v1101 = vadd.f32 %v1085, -0.00073499064
    %v1102 = vadd.f32 %v1086, -0.00073499064
    %v1103 = vadd.f32 %v1087, -0.00073499064
    %v1104 = vmul.f32 %v960, %v1088
    %v1105 = vmul.f32 %v961, %v1089
    %v1106 = vmul.f32 %v962, %v1090
    %v1107 = vmul.f32 %v963, %v1091
    %v1108 = vmul.f32 %v964, %v1092
    %v1109 = vmul.f32 %v965, %v1093
    %v1110 = vmul.f32 %v966, %v1094
    %v1111 = vmul.f32 %v967, %v1095
    %v1112 = vmul.f32 %v968, %v1096
    %v1113 = vmul.f32 %v969, %v1097
    %v1114 = vmul.f32 %v970, %v1098
    %v1115 = vmul.f32 %v971, %v1099
    %v1116 = vmul.f32 %v972, %v1100
    %v1117 = vmul.f32 %v973, %v1101
    %v1118 = vmul.f32 %v974, %v1102
    %v1119 = vmul.f32 %v975, %v1103
    %v1120 = vadd.f32 %v1104, -0.0029546
    %v1121 = vadd.f32 %v1105, -0.0029546
    %v1122 = vadd.f32 %v1106, -0.0029546
    %v1123 = vadd.f32 %v1107, -0.0029546
    %v1124 = vadd.f32 %v1108, -0.0029546
    %v1125 = vadd.f32 %v1109, -0.0029546
    %v1126 = vadd.f32 %v1110, -0.0029546
    %v1127 = vadd.f32 %v1111, -0.0029546
    %v1128 = vadd.f32 %v1112, -0.0029546
    %v1129 = vadd.f32 %v1113, -0.0029546
    %v1130 = vadd.f32 %v1114, -0.0029546
    %v1131 = vadd.f32 %v1115, -0.0029546
    %v1132 = vadd.f32 %v1116, -0.0029546
    %v1133 = vadd.f32 %v1117, -0.0029546
    %v1134 = vadd.f32 %v1118, -0.0029546
    %v1135 = vadd.f32 %v1119, -0.0029546
    %v1136 = vmul.f32 %v960, %v1120
    %v1137 = vmul.f32 %v961, %v1121
    %v1138 = vmul.f32 %v962, %v1122
    %v1139 = vmul.f32 %v963, %v1123
    %v1140 = vmul.f32 %v964, %v1124
    %v1141 = vmul.f32 %v965, %v1125
    %v1142 = vmul.f32 %v966, %v1126
    %v1143 = vmul.f32 %v967, %v1127
    %v1144 = vmul.f32 %v968, %v1128
    %v1145 = vmul.f32 %v969, %v1129
    %v1146 = vmul.f32 %v970, %v1130
    %v1147 = vmul.f32 %v971, %v1131
    %v1148 = vmul.f32 %v972, %v1132
    %v1149 = vmul.f32 %v973, %v1133
    %v1150 = vmul.f32 %v974, %v1134
    %v1151 = vmul.f32 %v975, %v1135
    %v1152 = vadd.f32 %v1136, -0.016096033
    %v1153 = vadd.f32 %v1137, -0.016096033
    %v1154 = vadd.f32 %v1138, -0.016096033
    %v1155 = vadd.f32 %v1139, -0.016096033
    %v1156 = vadd.f32 %v1140, -0.016096033
    %v1157 = vadd.f32 %v1141, -0.016096033
    %v1158 = vadd.f32 %v1142, -0.016096033
    %v1159 = vadd.f32 %v1143, -0.016096033
    %v1160 = vadd.f32 %v1144, -0.016096033
    %v1161 = vadd.f32 %v1145, -0.016096033
    %v1162 = vadd.f32 %v1146, -0.016096033
    %v1163 = vadd.f32 %v1147, -0.016096033
    %v1164 = vadd.f32 %v1148, -0.016096033
    %v1165 = vadd.f32 %v1149, -0.016096033
    %v1166 = vadd.f32 %v1150, -0.016096033
    %v1167 = vadd.f32 %v1151, -0.016096033
    %v1168 = vmul.f32 %v944, %v1152
    %v1169 = vmul.f32 %v945, %v1153
    %v1170 = vmul.f32 %v946, %v1154
    %v1171 = vmul.f32 %v947, %v1155
    %v1172 = vmul.f32 %v948, %v1156
    %v1173 = vmul.f32 %v949, %v1157
    %v1174 = vmul.f32 %v950, %v1158
    %v1175 = vmul.f32 %v951, %v1159
    %v1176 = vmul.f32 %v952, %v1160
    %v1177 = vmul.f32 %v953, %v1161
    %v1178 = vmul.f32 %v954, %v1162
    %v1179 = vmul.f32 %v955, %v1163
    %v1180 = vmul.f32 %v956, %v1164
    %v1181 = vmul.f32 %v957, %v1165
    %v1182 = vmul.f32 %v958, %v1166
    %v1183 = vmul.f32 %v959, %v1167
    %v1184 = vmul.f32 %v960, -1.45660715e-05
    %v1185 = vmul.f32 %v961, -1.45660715e-05
    %v1186 = vmul.f32 %v962, -1.45660715e-05
    %v1187 = vmul.f32 %v963, -1.45660715e-05
    %v1188 = vmul.f32 %v964, -1.45660715e-05
    %v1189 = vmul.f32 %v965, -1.45660715e-05
    %v1190 = vmul.f32 %v966, -1.45660715e-05
    %v1191 = vmul.f32 %v967, -1.45660715e-05
    %v1192 = vmul.f32 %v968, -1.45660715e-05
    %v1193 = vmul.f32 %v969, -1.45660715e-05
    %v1194 = vmul.f32 %v970, -1.45660715e-05
    %v1195 = vmul.f32 %v971, -1.45660715e-05
    %v1196 = vmul.f32 %v972, -1.45660715e-05
    %v1197 = vmul.f32 %v973, -1.45660715e-05
    %v1198 = vmul.f32 %v974, -1.45660715e-05
    %v1199 = vmul.f32 %v975, -1.45660715e-05
    %v1200 = vadd.f32 %v1184, -0.00021337405
    %v1201 = vadd.f32 %v1185, -0.00021337405
    %v1202 = vadd.f32 %v1186, -0.00021337405
    %v1203 = vadd.f32 %v1187, -0.00021337405
    %v1204 = vadd.f32 %v1188, -0.00021337405
    %v1205 = vadd.f32 %v1189, -0.00021337405
    %v1206 = vadd.f32 %v1190, -0.00021337405
    %v1207 = vadd.f32 %v1191, -0.00021337405
    %v1208 = vadd.f32 %v1192, -0.00021337405
    %v1209 = vadd.f32 %v1193, -0.00021337405
    %v1210 = vadd.f32 %v1194, -0.00021337405
    %v1211 = vadd.f32 %v1195, -0.00021337405
    %v1212 = vadd.f32 %v1196, -0.00021337405
    %v1213 = vadd.f32 %v1197, -0.00021337405
    %v1214 = vadd.f32 %v1198, -0.00021337405
    %v1215 = vadd.f32 %v1199, -0.00021337405
    %v1216 = vmul.f32 %v960, %v1200
    %v1217 = vmul.f32 %v961, %v1201
    %v1218 = vmul.f32 %v962, %v1202
    %v1219 = vmul.f32 %v963, %v1203
    %v1220 = vmul.f32 %v964, %v1204
    %v1221 = vmul.f32 %v965, %v1205
    %v1222 = vmul.f32 %v966, %v1206
    %v1223 = vmul.f32 %v967, %v1207
    %v1224 = vmul.f32 %v968, %v1208
    %v1225 = vmul.f32 %v969, %v1209
    %v1226 = vmul.f32 %v970, %v1210
    %v1227 = vmul.f32 %v971, %v1211
    %v1228 = vmul.f32 %v972, %v1212
    %v1229 = vmul.f32 %v973, %v1213
    %v1230 = vmul.f32 %v974, %v1214
    %v1231 = vmul.f32 %v975, %v1215
    %v1232 = vadd.f32 %v1216, -0.001682827
    %v1233 = vadd.f32 %v1217, -0.001682827
    %v1234 = vadd.f32 %v1218, -0.001682827
    %v1235 = vadd.f32 %v1219, -0.001682827
    %v1236 = vadd.f32 %v1220, -0.001682827
    %v1237 = vadd.f32 %v1221, -0.001682827
    %v1238 = vadd.f32 %v1222, -0.001682827
    %v1239 = vadd.f32 %v1223, -0.001682827
    %v1240 = vadd.f32 %v1224, -0.001682827
    %v1241 = vadd.f32 %v1225, -0.001682827
    %v1242 = vadd.f32 %v1226, -0.001682827
    %v1243 = vadd.f32 %v1227, -0.001682827
    %v1244 = vadd.f32 %v1228, -0.001682827
    %v1245 = vadd.f32 %v1229, -0.001682827
    %v1246 = vadd.f32 %v1230, -0.001682827
    %v1247 = vadd.f32 %v1231, -0.001682827
    %v1248 = vmul.f32 %v960, %v1232
    %v1249 = vmul.f32 %v961, %v1233
    %v1250 = vmul.f32 %v962, %v1234
    %v1251 = vmul.f32 %v963, %v1235
    %v1252 = vmul.f32 %v964, %v1236
    %v1253 = vmul.f32 %v965, %v1237
    %v1254 = vmul.f32 %v966, %v1238
    %v1255 = vmul.f32 %v967, %v1239
    %v1256 = vmul.f32 %v968, %v1240
    %v1257 = vmul.f32 %v969, %v1241
    %v1258 = vmul.f32 %v970, %v1242
    %v1259 = vmul.f32 %v971, %v1243
    %v1260 = vmul.f32 %v972, %v1244
    %v1261 = vmul.f32 %v973, %v1245
    %v1262 = vmul.f32 %v974, %v1246
    %v1263 = vmul.f32 %v975, %v1247
    %v1264 = vadd.f32 %v1248, -0.0073733293
    %v1265 = vadd.f32 %v1249, -0.0073733293
    %v1266 = vadd.f32 %v1250, -0.0073733293
    %v1267 = vadd.f32 %v1251, -0.0073733293
    %v1268 = vadd.f32 %v1252, -0.0073733293
    %v1269 = vadd.f32 %v1253, -0.0073733293
    %v1270 = vadd.f32 %v1254, -0.0073733293
    %v1271 = vadd.f32 %v1255, -0.0073733293
    %v1272 = vadd.f32 %v1256, -0.0073733293
    %v1273 = vadd.f32 %v1257, -0.0073733293
    %v1274 = vadd.f32 %v1258, -0.0073733293
    %v1275 = vadd.f32 %v1259, -0.0073733293
    %v1276 = vadd.f32 %v1260, -0.0073733293
    %v1277 = vadd.f32 %v1261, -0.0073733293
    %v1278 = vadd.f32 %v1262, -0.0073733293
    %v1279 = vadd.f32 %v1263, -0.0073733293
    %v1280 = vmul.f32 %v960, %v1264
    %v1281 = vmul.f32 %v961, %v1265
    %v1282 = vmul.f32 %v962, %v1266
    %v1283 = vmul.f32 %v963, %v1267
    %v1284 = vmul.f32 %v964, %v1268
    %v1285 = vmul.f32 %v965, %v1269
    %v1286 = vmul.f32 %v966, %v1270
    %v1287 = vmul.f32 %v967, %v1271
    %v1288 = vmul.f32 %v968, %v1272
    %v1289 = vmul.f32 %v969, %v1273
    %v1290 = vmul.f32 %v970, %v1274
    %v1291 = vmul.f32 %v971, %v1275
    %v1292 = vmul.f32 %v972, %v1276
    %v1293 = vmul.f32 %v973, %v1277
    %v1294 = vmul.f32 %v974, %v1278
    %v1295 = vmul.f32 %v975, %v1279
    %v1296 = vadd.f32 %v1280, -0.014264739
    %v1297 = vadd.f32 %v1281, -0.014264739
    %v1298 = vadd.f32 %v1282, -0.014264739
    %v1299 = vadd.f32 %v1283, -0.014264739
    %v1300 = vadd.f32 %v1284, -0.014264739
    %v1301 = vadd.f32 %v1285, -0.014264739
    %v1302 = vadd.f32 %v1286, -0.014264739
    %v1303 = vadd.f32 %v1287, -0.014264739
    %v1304 = vadd.f32 %v1288, -0.014264739
    %v1305 = vadd.f32 %v1289, -0.014264739
    %v1306 = vadd.f32 %v1290, -0.014264739
    %v1307 = vadd.f32 %v1291, -0.014264739
    %v1308 = vadd.f32 %v1292, -0.014264739
    %v1309 = vadd.f32 %v1293, -0.014264739
    %v1310 = vadd.f32 %v1294, -0.014264739
    %v1311 = vadd.f32 %v1295, -0.014264739
    %v1312 = vrcp.pop %v1296
    %v1313 = vrcp.pop %v1297
    %v1314 = vrcp.pop %v1298
    %v1315 = vrcp.pop %v1299
    %v1316 = vrcp.pop %v1300
    %v1317 = vrcp.pop %v1301
    %v1318 = vrcp.pop %v1302
    %v1319 = vrcp.pop %v1303
    %v1320 = vrcp.pop %v1304
    %v1321 = vrcp.pop %v1305
    %v1322 = vrcp.pop %v1306
    %v1323 = vrcp.pop %v1307
    %v1324 = vrcp.pop %v1308
    %v1325 = vrcp.pop %v1309
    %v1326 = vrcp.pop %v1310
    %v1327 = vrcp.pop %v1311
    %v1328 = vmul.f32 %v1168, %v1312
    %v1329 = vmul.f32 %v1169, %v1313
    %v1330 = vmul.f32 %v1170, %v1314
    %v1331 = vmul.f32 %v1171, %v1315
    %v1332 = vmul.f32 %v1172, %v1316
    %v1333 = vmul.f32 %v1173, %v1317
    %v1334 = vmul.f32 %v1174, %v1318
    %v1335 = vmul.f32 %v1175, %v1319
    %v1336 = vmul.f32 %v1176, %v1320
    %v1337 = vmul.f32 %v1177, %v1321
    %v1338 = vmul.f32 %v1178, %v1322
    %v1339 = vmul.f32 %v1179, %v1323
    %v1340 = vmul.f32 %v1180, %v1324
    %v1341 = vmul.f32 %v1181, %v1325
    %v1342 = vmul.f32 %v1182, %v1326
    %v1343 = vmul.f32 %v1183, %v1327
    %v1344 = vadd.f32 %v1328, 1.0
    %v1345 = vadd.f32 %v1329, 1.0
    %v1346 = vadd.f32 %v1330, 1.0
    %v1347 = vadd.f32 %v1331, 1.0
    %v1348 = vadd.f32 %v1332, 1.0
    %v1349 = vadd.f32 %v1333, 1.0
    %v1350 = vadd.f32 %v1334, 1.0
    %v1351 = vadd.f32 %v1335, 1.0
    %v1352 = vadd.f32 %v1336, 1.0
    %v1353 = vadd.f32 %v1337, 1.0
    %v1354 = vadd.f32 %v1338, 1.0
    %v1355 = vadd.f32 %v1339, 1.0
    %v1356 = vadd.f32 %v1340, 1.0
    %v1357 = vadd.f32 %v1341, 1.0
    %v1358 = vadd.f32 %v1342, 1.0
    %v1359 = vadd.f32 %v1343, 1.0
    %v1360 = vmul.f32 %v896, %v1344
    %v1361 = vmul.f32 %v897, %v1345
    %v1362 = vmul.f32 %v898, %v1346
    %v1363 = vmul.f32 %v899, %v1347
    %v1364 = vmul.f32 %v900, %v1348
    %v1365 = vmul.f32 %v901, %v1349
    %v1366 = vmul.f32 %v902, %v1350
    %v1367 = vmul.f32 %v903, %v1351
    %v1368 = vmul.f32 %v904, %v1352
    %v1369 = vmul.f32 %v905, %v1353
    %v1370 = vmul.f32 %v906, %v1354
    %v1371 = vmul.f32 %v907, %v1355
    %v1372 = vmul.f32 %v908, %v1356
    %v1373 = vmul.f32 %v909, %v1357
    %v1374 = vmul.f32 %v910, %v1358
    %v1375 = vmul.f32 %v911, %v1359
    %v1376 = vld [vmem:[%s2] sm:$0xff]
    %v1377 = vld [vmem:[%s2 + $0x8] sm:$0xff]
    %v1378 = vld [vmem:[%s2 + $0x10] sm:$0xff]
    %v1379 = vld [vmem:[%s2 + $0x18] sm:$0xff]
    %1380 = vset.pattern.permute.xlu0 12
    %1381 = vperm.xlu0 %1380, %v38
    %v1382 = vpop.permute.xlu0 %1381
    %1384 = vset.pattern.permute.xlu0 12
    %1385 = vperm.xlu0 %1384, %v39
    %v1386 = vpop.permute.xlu0 %1385
    %1388 = vset.pattern.permute.xlu0 12
    %1389 = vperm.xlu0 %1388, %v40
    %v1390 = vpop.permute.xlu0 %1389
    %1392 = vset.pattern.permute.xlu0 12
    %1393 = vperm.xlu0 %1392, %v41
    %v1394 = vpop.permute.xlu0 %1393
    %vm1396 = vcmask 261120
    %v1398 = vsel %vm1396, %v1376, 0
    %v1401 = vsel %vm1396, %v1377, 0
    %v1404 = vsel %vm1396, %v1378, 0
    %v1407 = vsel %vm1396, %v1379, 0
    %1409 = vmatprep.subr.mxu0 0.0
    %1410 = vmatpush1.msra.mxu0 0.0
    %1411 = vmatprep.subr.mxu0 0.0
    %1412 = vmatpush1.msra.mxu0 0.0
    %1413 = vmatprep.subr.mxu0 0.0
    %1414 = vmatpush1.msra.mxu0 0.0
    %1415 = vmatprep.subr.mxu0 0.0
    %1416 = vmatpush1.msra.mxu0 0.0
    %1417 = vmatprep.subr.mxu0 0.0
    %1418 = vmatpush1.msra.mxu0 0.0
    %1419 = vmatprep.subr.mxu0 0.0
    %1420 = vmatpush1.msra.mxu0 0.0
    %1421 = vmatprep.subr.mxu0 0.0
    %1422 = vmatpush1.msra.mxu0 0.0
    %1423 = vmatprep.subr.mxu0 0.0
    %1424 = vmatpush1.msra.mxu0 0.0
    %1425 = vmatprep.subr.mxu0 0.0
    %1426 = vmatpush1.msra.mxu0 0.0
    %1427 = vmatprep.subr.mxu0 0.0
    %1428 = vmatpush1.msra.mxu0 0.0
    %1429 = vmatprep.subr.mxu0 0.0
    %1430 = vmatpush1.msra.mxu0 0.0
    %1431 = vmatprep.subr.mxu0 0.0
    %1432 = vmatpush1.msra.mxu0 0.0
    %1433 = vmatprep.subr.mxu0 %v1373
    %1434 = vmatpush1.msra.mxu0 %v1372
    %1435 = vmatprep.subr.mxu0 %v1369
    %1436 = vmatpush1.msra.mxu0 %v1368
    %1437 = vmatprep.subr.mxu0 %v1365
    %1438 = vmatpush1.msra.mxu0 %v1364
    %1439 = vmatprep.subr.mxu0 %v1361
    %1440 = vmatpush1.msra.mxu0 %v1360
    %1441 = vmatprep.subr.mxu0 0.0
    %1442 = vmatpush2.msra.mxu0 0.0
    %1443 = vmatprep.subr.mxu0 0.0
    %1444 = vmatpush2.msra.mxu0 0.0
    %1445 = vmatprep.subr.mxu0 0.0
    %1446 = vmatpush2.msra.mxu0 0.0
    %1447 = vmatprep.subr.mxu0 0.0
    %1448 = vmatpush2.msra.mxu0 0.0
    %1449 = vmatprep.subr.mxu0 0.0
    %1450 = vmatpush2.msra.mxu0 0.0
    %1451 = vmatprep.subr.mxu0 0.0
    %1452 = vmatpush2.msra.mxu0 0.0
    %1453 = vmatprep.subr.mxu0 0.0
    %1454 = vmatpush2.msra.mxu0 0.0
    %1455 = vmatprep.subr.mxu0 0.0
    %1456 = vmatpush2.msra.mxu0 0.0
    %1457 = vmatprep.subr.mxu0 0.0
    %1458 = vmatpush2.msra.mxu0 0.0
    %1459 = vmatprep.subr.mxu0 0.0
    %1460 = vmatpush2.msra.mxu0 0.0
    %1461 = vmatprep.subr.mxu0 0.0
    %1462 = vmatpush2.msra.mxu0 0.0
    %1463 = vmatprep.subr.mxu0 0.0
    %1464 = vmatpush2.msra.mxu0 0.0
    %1465 = vmatprep.subr.mxu0 0.0
    %1466 = vmatpush2.msra.mxu0 0.0
    %1467 = vmatprep.subr.mxu0 0.0
    %1468 = vmatpush2.msra.mxu0 0.0
    %1469 = vmatprep.subr.mxu0 0.0
    %1470 = vmatpush2.msra.mxu0 0.0
    %1471 = vmatprep.subr.mxu0 0.0
    %1472 = vmatpush2.msra.mxu0 0.0
    %1473 = vmatprep.mubr.f32.mxu0 0.0
    %1474 = vmatmul.mubr.f32.gmra.mxu0 %v1398
    %v1475 = vpop.f32.mrf.mxu0
    %v1476 = vadd.f32 %v1382, %v1475
    %v1477 = vpop.f32.mrf.mxu0
    %v1478 = vadd.f32 %v1382, %v1477
    %1479 = vmatprep.mubr.f32.mxu0 0.0
    %1480 = vmatmul.mubr.f32.gmra.mxu0 %v1401
    %v1481 = vpop.f32.mrf.mxu0
    %v1482 = vadd.f32 %v1386, %v1481
    %v1483 = vpop.f32.mrf.mxu0
    %v1484 = vadd.f32 %v1386, %v1483
    %1485 = vmatprep.mubr.f32.mxu0 0.0
    %1486 = vmatmul.mubr.f32.gmra.mxu0 %v1404
    %v1487 = vpop.f32.mrf.mxu0
    %v1488 = vadd.f32 %v1390, %v1487
    %v1489 = vpop.f32.mrf.mxu0
    %v1490 = vadd.f32 %v1390, %v1489
    %1491 = vmatprep.mubr.f32.mxu0 0.0
    %1492 = vmatmul.mubr.f32.gmra.mxu0 %v1407
    %v1493 = vpop.f32.mrf.mxu0
    %v1494 = vadd.f32 %v1394, %v1493
    %v1495 = vpop.f32.mrf.mxu0
    %v1496 = vadd.f32 %v1394, %v1495
    %1497 = vdwg.mxu0
    %1498 = vmatprep.subr.mxu0 0.0
    %1499 = vmatpush1.msra.mxu0 0.0
    %1500 = vmatprep.subr.mxu0 0.0
    %1501 = vmatpush1.msra.mxu0 0.0
    %1502 = vmatprep.subr.mxu0 0.0
    %1503 = vmatpush1.msra.mxu0 0.0
    %1504 = vmatprep.subr.mxu0 0.0
    %1505 = vmatpush1.msra.mxu0 0.0
    %1506 = vmatprep.subr.mxu0 0.0
    %1507 = vmatpush1.msra.mxu0 0.0
    %1508 = vmatprep.subr.mxu0 0.0
    %1509 = vmatpush1.msra.mxu0 0.0
    %1510 = vmatprep.subr.mxu0 0.0
    %1511 = vmatpush1.msra.mxu0 0.0
    %1512 = vmatprep.subr.mxu0 0.0
    %1513 = vmatpush1.msra.mxu0 0.0
    %1514 = vmatprep.subr.mxu0 0.0
    %1515 = vmatpush1.msra.mxu0 0.0
    %1516 = vmatprep.subr.mxu0 0.0
    %1517 = vmatpush1.msra.mxu0 0.0
    %1518 = vmatprep.subr.mxu0 0.0
    %1519 = vmatpush1.msra.mxu0 0.0
    %1520 = vmatprep.subr.mxu0 0.0
    %1521 = vmatpush1.msra.mxu0 0.0
    %1522 = vmatprep.subr.mxu0 %v1375
    %1523 = vmatpush1.msra.mxu0 %v1374
    %1524 = vmatprep.subr.mxu0 %v1371
    %1525 = vmatpush1.msra.mxu0 %v1370
    %1526 = vmatprep.subr.mxu0 %v1367
    %1527 = vmatpush1.msra.mxu0 %v1366
    %1528 = vmatprep.subr.mxu0 %v1363
    %1529 = vmatpush1.msra.mxu0 %v1362
    %1530 = vmatprep.subr.mxu0 0.0
    %1531 = vmatpush2.msra.mxu0 0.0
    %1532 = vmatprep.subr.mxu0 0.0
    %1533 = vmatpush2.msra.mxu0 0.0
    %1534 = vmatprep.subr.mxu0 0.0
    %1535 = vmatpush2.msra.mxu0 0.0
    %1536 = vmatprep.subr.mxu0 0.0
    %1537 = vmatpush2.msra.mxu0 0.0
    %1538 = vmatprep.subr.mxu0 0.0
    %1539 = vmatpush2.msra.mxu0 0.0
    %1540 = vmatprep.subr.mxu0 0.0
    %1541 = vmatpush2.msra.mxu0 0.0
    %1542 = vmatprep.subr.mxu0 0.0
    %1543 = vmatpush2.msra.mxu0 0.0
    %1544 = vmatprep.subr.mxu0 0.0
    %1545 = vmatpush2.msra.mxu0 0.0
    %1546 = vmatprep.subr.mxu0 0.0
    %1547 = vmatpush2.msra.mxu0 0.0
    %1548 = vmatprep.subr.mxu0 0.0
    %1549 = vmatpush2.msra.mxu0 0.0
    %1550 = vmatprep.subr.mxu0 0.0
    %1551 = vmatpush2.msra.mxu0 0.0
    %1552 = vmatprep.subr.mxu0 0.0
    %1553 = vmatpush2.msra.mxu0 0.0
    %1554 = vmatprep.subr.mxu0 0.0
    %1555 = vmatpush2.msra.mxu0 0.0
    %1556 = vmatprep.subr.mxu0 0.0
    %1557 = vmatpush2.msra.mxu0 0.0
    %1558 = vmatprep.subr.mxu0 0.0
    %1559 = vmatpush2.msra.mxu0 0.0
    %1560 = vmatprep.subr.mxu0 0.0
    %1561 = vmatpush2.msra.mxu0 0.0
    %1562 = vmatprep.mubr.f32.mxu0 0.0
    %1563 = vmatmul.mubr.f32.gmra.mxu0 %v1398
    %v1564 = vpop.f32.mrf.mxu0
    %v1565 = vadd.f32 %v1382, %v1564
    %v1566 = vpop.f32.mrf.mxu0
    %v1567 = vadd.f32 %v1382, %v1566
    %1568 = vmatprep.mubr.f32.mxu0 0.0
    %1569 = vmatmul.mubr.f32.gmra.mxu0 %v1401
    %v1570 = vpop.f32.mrf.mxu0
    %v1571 = vadd.f32 %v1386, %v1570
    %v1572 = vpop.f32.mrf.mxu0
    %v1573 = vadd.f32 %v1386, %v1572
    %1574 = vmatprep.mubr.f32.mxu0 0.0
    %1575 = vmatmul.mubr.f32.gmra.mxu0 %v1404
    %v1576 = vpop.f32.mrf.mxu0
    %v1577 = vadd.f32 %v1390, %v1576
    %v1578 = vpop.f32.mrf.mxu0
    %v1579 = vadd.f32 %v1390, %v1578
    %1580 = vmatprep.mubr.f32.mxu0 0.0
    %1581 = vmatmul.mubr.f32.gmra.mxu0 %v1407
    %v1582 = vpop.f32.mrf.mxu0
    %v1583 = vadd.f32 %v1394, %v1582
    %v1584 = vpop.f32.mrf.mxu0
    %v1585 = vadd.f32 %v1394, %v1584
    %1586 = vdwg.mxu0
    %v1587 = vadd.f32 %v1476, %v111
    %v1588 = vadd.f32 %v1478, %v112
    %v1589 = vadd.f32 %v1565, %v113
    %v1590 = vadd.f32 %v1567, %v114
    %v1591 = vadd.f32 %v1482, %v115
    %v1592 = vadd.f32 %v1484, %v116
    %v1593 = vadd.f32 %v1571, %v117
    %v1594 = vadd.f32 %v1573, %v118
    %v1595 = vadd.f32 %v1488, %v119
    %v1596 = vadd.f32 %v1490, %v120
    %v1597 = vadd.f32 %v1577, %v121
    %v1598 = vadd.f32 %v1579, %v122
    %v1599 = vadd.f32 %v1494, %v123
    %v1600 = vadd.f32 %v1496, %v124
    %v1601 = vadd.f32 %v1583, %v125
    %v1602 = vadd.f32 %v1585, %v126
    %v1603 = vld [vmem:[%s4] sm:$0xff]
    %v1604 = vld [vmem:[%s4 + $0x8] sm:$0xff]
    %v1605 = vld [vmem:[%s4 + $0x10] sm:$0xff]
    %v1606 = vld [vmem:[%s4 + $0x18] sm:$0xff]
    %v1607 = vld [vmem:[%s5] sm:$0x1]
    %v1608 = vadd.f32 %v1587, %v1588
    %1609 = vadd.xlane.f32.xlu0 %v1608
    %v1610 = vpop.xlane.xlu0 %1609
    %v1611 = vadd.f32 %v1591, %v1592
    %1612 = vadd.xlane.f32.xlu0 %v1611
    %v1613 = vpop.xlane.xlu0 %1612
    %v1614 = vadd.f32 %v1595, %v1596
    %1615 = vadd.xlane.f32.xlu0 %v1614
    %v1616 = vpop.xlane.xlu0 %1615
    %v1617 = vadd.f32 %v1599, %v1600
    %1618 = vadd.xlane.f32.xlu0 %v1617
    %v1619 = vpop.xlane.xlu0 %1618
    %v1620 = vrcp.pop 256.0
    %v1621 = vmul.f32 %v1610, %v1620
    %v1622 = vmul.f32 %v1613, %v1620
    %v1623 = vmul.f32 %v1616, %v1620
    %v1624 = vmul.f32 %v1619, %v1620
    %v1625 = vmul.f32 %v1603, %v1621
    %v1626 = vmul.f32 %v1604, %v1622
    %v1627 = vmul.f32 %v1605, %v1623
    %v1628 = vmul.f32 %v1606, %v1624
    %vm1629 = vcmask 64512
    %v1630 = vsel %vm1629, %v1625, 0.0
    %v1631 = vsel %vm1629, %v1626, 0.0
    %v1632 = vadd.f32 %v1630, %v1631
    %v1633 = vsel %vm1629, %v1627, 0.0
    %v1634 = vadd.f32 %v1632, %v1633
    %v1635 = vsel %vm1629, %v1628, 0.0
    %v1636 = vadd.f32 %v1634, %v1635
    %v1637 = vrot.slane %v1636, 4
    %v1638 = vadd.f32 %v1636, %v1637
    %v1639 = vrot.slane %v1638, 2
    %v1640 = vadd.f32 %v1638, %v1639
    %v1641 = vrot.slane %v1640, 1
    %v1642 = vadd.f32 %v1640, %v1641
    %v1643 = vadd.f32 %v1642, %v1607
    %v1644 = vmax.f32 %v1643, 0.0
    %v1645 = vlaneseq
    %v1646 = vshrl.u32 %v1645, 7
    %v1647 = vsub.s32 0, %v1646
    %v1648 = vrot.slane %v1644, %v1647
    %1650 = vrot.lane.b32.xlu0 %v1648, 8
    %v1651 = vpop.permute.xlu0 %1650
    %v1653 = vmul.f32 %v1603, %v1651
    %v1654 = vmul.f32 %v1604, %v1651
    %v1655 = vmul.f32 %v1605, %v1651
    %v1656 = vmul.f32 %v1606, %v1651
    %1661 = vrot.lane.b32.xlu0 %v1653, 120
    %v1662 = vpop.permute.xlu0 %1661
    %1663 = vrot.lane.b32.xlu0 %v1654, 120
    %v1664 = vpop.permute.xlu0 %1663
    %1665 = vrot.lane.b32.xlu0 %v1655, 120
    %v1666 = vpop.permute.xlu0 %1665
    %1667 = vrot.lane.b32.xlu0 %v1656, 120
    %v1668 = vpop.permute.xlu0 %1667
    %v1673 = vsel %vm1629, %v1662, 0.0
    %1674 = vadd.xlane.f32.xlu0 %v1673
    %v1675 = vpop.xlane.xlu0 %1674
    %v1676 = vsel %vm1629, %v1664, 0.0
    %1677 = vadd.xlane.f32.xlu0 %v1676
    %v1678 = vpop.xlane.xlu0 %1677
    %v1679 = vsel %vm1629, %v1666, 0.0
    %1680 = vadd.xlane.f32.xlu0 %v1679
    %v1681 = vpop.xlane.xlu0 %1680
    %v1682 = vsel %vm1629, %v1668, 0.0
    %1683 = vadd.xlane.f32.xlu0 %v1682
    %v1684 = vpop.xlane.xlu0 %1683
    %v1685 = vadd.f32 %v1675, %v38
    %v1686 = vadd.f32 %v1678, %v39
    %v1687 = vadd.f32 %v1681, %v40
    %v1688 = vadd.f32 %v1684, %v41
    %v1689 = vxor.u32 %v1685, 2147483648
    %v1690 = vxor.u32 %v1686, 2147483648
    %v1691 = vxor.u32 %v1687, 2147483648
    %v1692 = vxor.u32 %v1688, 2147483648
    %v1693 = vmul.f32 %v1689, 1.442695
    %v1694 = vpow.pop %v1693
    %v1695 = vmul.f32 %v1690, 1.442695
    %v1696 = vpow.pop %v1695
    %v1697 = vmul.f32 %v1691, 1.442695
    %v1698 = vpow.pop %v1697
    %v1699 = vmul.f32 %v1692, 1.442695
    %v1700 = vpow.pop %v1699
    %v1701 = vadd.f32 %v1694, 1.0
    %v1702 = vadd.f32 %v1696, 1.0
    %v1703 = vadd.f32 %v1698, 1.0
    %v1704 = vadd.f32 %v1700, 1.0
    %v1705 = vrcp.pop %v1701
    %v1706 = vmul.f32 1.0, %v1705
    %v1707 = vrcp.pop %v1702
    %v1708 = vmul.f32 1.0, %v1707
    %v1709 = vrcp.pop %v1703
    %v1710 = vmul.f32 1.0, %v1709
    %v1711 = vrcp.pop %v1704
    %v1712 = vmul.f32 1.0, %v1711
    %1714 = vset.pattern.permute.xlu0 13
    %1715 = vperm.xlu0 %1714, %v1706
    %v1716 = vpop.permute.xlu0 %1715
    %1719 = vset.pattern.permute.xlu0 13
    %1720 = vperm.xlu0 %1719, %v1708
    %v1721 = vpop.permute.xlu0 %1720
    %1724 = vset.pattern.permute.xlu0 13
    %1725 = vperm.xlu0 %1724, %v1710
    %v1726 = vpop.permute.xlu0 %1725
    %1729 = vset.pattern.permute.xlu0 13
    %1730 = vperm.xlu0 %1729, %v1712
    %v1731 = vpop.permute.xlu0 %1730
    %v1733 = vmul.f32 %v1587, %v1716
    %v1734 = vmul.f32 %v1588, %v1716
    %v1735 = vmul.f32 %v1591, %v1721
    %v1736 = vmul.f32 %v1592, %v1721
    %v1737 = vmul.f32 %v1595, %v1726
    %v1738 = vmul.f32 %v1596, %v1726
    %v1739 = vmul.f32 %v1599, %v1731
    %v1740 = vmul.f32 %v1600, %v1731
    %v1741 = vadd.f32 %v1589, %v1590
    %1742 = vadd.xlane.f32.xlu0 %v1741
    %v1743 = vpop.xlane.xlu0 %1742
    %v1744 = vadd.f32 %v1593, %v1594
    %1745 = vadd.xlane.f32.xlu0 %v1744
    %v1746 = vpop.xlane.xlu0 %1745
    %v1747 = vadd.f32 %v1597, %v1598
    %1748 = vadd.xlane.f32.xlu0 %v1747
    %v1749 = vpop.xlane.xlu0 %1748
    %v1750 = vadd.f32 %v1601, %v1602
    %1751 = vadd.xlane.f32.xlu0 %v1750
    %v1752 = vpop.xlane.xlu0 %1751
    %v1753 = vmul.f32 %v1743, %v1620
    %v1754 = vmul.f32 %v1746, %v1620
    %v1755 = vmul.f32 %v1749, %v1620
    %v1756 = vmul.f32 %v1752, %v1620
    %v1757 = vmul.f32 %v1603, %v1753
    %v1758 = vmul.f32 %v1604, %v1754
    %v1759 = vmul.f32 %v1605, %v1755
    %v1760 = vmul.f32 %v1606, %v1756
    %v1761 = vsel %vm1629, %v1757, 0.0
    %v1762 = vsel %vm1629, %v1758, 0.0
    %v1763 = vadd.f32 %v1761, %v1762
    %v1764 = vsel %vm1629, %v1759, 0.0
    %v1765 = vadd.f32 %v1763, %v1764
    %v1766 = vsel %vm1629, %v1760, 0.0
    %v1767 = vadd.f32 %v1765, %v1766
    %v1768 = vrot.slane %v1767, 4
    %v1769 = vadd.f32 %v1767, %v1768
    %v1770 = vrot.slane %v1769, 2
    %v1771 = vadd.f32 %v1769, %v1770
    %v1772 = vrot.slane %v1771, 1
    %v1773 = vadd.f32 %v1771, %v1772
    %v1774 = vadd.f32 %v1773, %v1607
    %v1775 = vmax.f32 %v1774, 0.0
    %v1776 = vlaneseq
    %v1777 = vshrl.u32 %v1776, 7
    %v1778 = vsub.s32 0, %v1777
    %v1779 = vrot.slane %v1775, %v1778
    %1781 = vrot.lane.b32.xlu0 %v1779, 8
    %v1782 = vpop.permute.xlu0 %1781
    %v1784 = vmul.f32 %v1603, %v1782
    %v1785 = vmul.f32 %v1604, %v1782
    %v1786 = vmul.f32 %v1605, %v1782
    %v1787 = vmul.f32 %v1606, %v1782
    %1792 = vrot.lane.b32.xlu0 %v1784, 120
    %v1793 = vpop.permute.xlu0 %1792
    %1794 = vrot.lane.b32.xlu0 %v1785, 120
    %v1795 = vpop.permute.xlu0 %1794
    %1796 = vrot.lane.b32.xlu0 %v1786, 120
    %v1797 = vpop.permute.xlu0 %1796
    %1798 = vrot.lane.b32.xlu0 %v1787, 120
    %v1799 = vpop.permute.xlu0 %1798
    %v1804 = vsel %vm1629, %v1793, 0.0
    %1805 = vadd.xlane.f32.xlu0 %v1804
    %v1806 = vpop.xlane.xlu0 %1805
    %v1807 = vsel %vm1629, %v1795, 0.0
    %1808 = vadd.xlane.f32.xlu0 %v1807
    %v1809 = vpop.xlane.xlu0 %1808
    %v1810 = vsel %vm1629, %v1797, 0.0
    %1811 = vadd.xlane.f32.xlu0 %v1810
    %v1812 = vpop.xlane.xlu0 %1811
    %v1813 = vsel %vm1629, %v1799, 0.0
    %1814 = vadd.xlane.f32.xlu0 %v1813
    %v1815 = vpop.xlane.xlu0 %1814
    %v1816 = vadd.f32 %v1806, %v38
    %v1817 = vadd.f32 %v1809, %v39
    %v1818 = vadd.f32 %v1812, %v40
    %v1819 = vadd.f32 %v1815, %v41
    %v1820 = vxor.u32 %v1816, 2147483648
    %v1821 = vxor.u32 %v1817, 2147483648
    %v1822 = vxor.u32 %v1818, 2147483648
    %v1823 = vxor.u32 %v1819, 2147483648
    %v1824 = vmul.f32 %v1820, 1.442695
    %v1825 = vpow.pop %v1824
    %v1826 = vmul.f32 %v1821, 1.442695
    %v1827 = vpow.pop %v1826
    %v1828 = vmul.f32 %v1822, 1.442695
    %v1829 = vpow.pop %v1828
    %v1830 = vmul.f32 %v1823, 1.442695
    %v1831 = vpow.pop %v1830
    %v1832 = vadd.f32 %v1825, 1.0
    %v1833 = vadd.f32 %v1827, 1.0
    %v1834 = vadd.f32 %v1829, 1.0
    %v1835 = vadd.f32 %v1831, 1.0
    %v1836 = vrcp.pop %v1832
    %v1837 = vmul.f32 1.0, %v1836
    %v1838 = vrcp.pop %v1833
    %v1839 = vmul.f32 1.0, %v1838
    %v1840 = vrcp.pop %v1834
    %v1841 = vmul.f32 1.0, %v1840
    %v1842 = vrcp.pop %v1835
    %v1843 = vmul.f32 1.0, %v1842
    %1845 = vset.pattern.permute.xlu0 13
    %1846 = vperm.xlu0 %1845, %v1837
    %v1847 = vpop.permute.xlu0 %1846
    %1850 = vset.pattern.permute.xlu0 13
    %1851 = vperm.xlu0 %1850, %v1839
    %v1852 = vpop.permute.xlu0 %1851
    %1855 = vset.pattern.permute.xlu0 13
    %1856 = vperm.xlu0 %1855, %v1841
    %v1857 = vpop.permute.xlu0 %1856
    %1860 = vset.pattern.permute.xlu0 13
    %1861 = vperm.xlu0 %1860, %v1843
    %v1862 = vpop.permute.xlu0 %1861
    %v1864 = vmul.f32 %v1589, %v1847
    %v1865 = vmul.f32 %v1590, %v1847
    %v1866 = vmul.f32 %v1593, %v1852
    %v1867 = vmul.f32 %v1594, %v1852
    %v1868 = vmul.f32 %v1597, %v1857
    %v1869 = vmul.f32 %v1598, %v1857
    %v1870 = vmul.f32 %v1601, %v1862
    %v1871 = vmul.f32 %v1602, %v1862
    %v1872 = vld [vmem:[%s3] sm:$0xff]
    %v1873 = vld [vmem:[%s3 + $0x8] sm:$0xff]
    %v1874 = vld [vmem:[%s3 + $0x10] sm:$0xff]
    %v1875 = vld [vmem:[%s3 + $0x18] sm:$0xff]
    %1876 = vset.pattern.permute.xlu0 14
    %1877 = vperm.xlu0 %1876, %v38
    %v1878 = vpop.permute.xlu0 %1877
    %1880 = vset.pattern.permute.xlu0 14
    %1881 = vperm.xlu0 %1880, %v39
    %v1882 = vpop.permute.xlu0 %1881
    %1884 = vset.pattern.permute.xlu0 14
    %1885 = vperm.xlu0 %1884, %v40
    %v1886 = vpop.permute.xlu0 %1885
    %1888 = vset.pattern.permute.xlu0 14
    %1889 = vperm.xlu0 %1888, %v41
    %v1890 = vpop.permute.xlu0 %1889
    %v1893 = vsel %vm1396, %v1872, 0
    %v1896 = vsel %vm1396, %v1873, 0
    %v1899 = vsel %vm1396, %v1874, 0
    %v1902 = vsel %vm1396, %v1875, 0
    %1904 = vmatprep.subr.mxu0 0.0
    %1905 = vmatpush1.msra.mxu0 0.0
    %1906 = vmatprep.subr.mxu0 0.0
    %1907 = vmatpush1.msra.mxu0 0.0
    %1908 = vmatprep.subr.mxu0 0.0
    %1909 = vmatpush1.msra.mxu0 0.0
    %1910 = vmatprep.subr.mxu0 0.0
    %1911 = vmatpush1.msra.mxu0 0.0
    %1912 = vmatprep.subr.mxu0 0.0
    %1913 = vmatpush1.msra.mxu0 0.0
    %1914 = vmatprep.subr.mxu0 0.0
    %1915 = vmatpush1.msra.mxu0 0.0
    %1916 = vmatprep.subr.mxu0 0.0
    %1917 = vmatpush1.msra.mxu0 0.0
    %1918 = vmatprep.subr.mxu0 0.0
    %1919 = vmatpush1.msra.mxu0 0.0
    %1920 = vmatprep.subr.mxu0 0.0
    %1921 = vmatpush1.msra.mxu0 0.0
    %1922 = vmatprep.subr.mxu0 0.0
    %1923 = vmatpush1.msra.mxu0 0.0
    %1924 = vmatprep.subr.mxu0 0.0
    %1925 = vmatpush1.msra.mxu0 0.0
    %1926 = vmatprep.subr.mxu0 0.0
    %1927 = vmatpush1.msra.mxu0 0.0
    %1928 = vmatprep.subr.mxu0 %v1740
    %1929 = vmatpush1.msra.mxu0 %v1739
    %1930 = vmatprep.subr.mxu0 %v1738
    %1931 = vmatpush1.msra.mxu0 %v1737
    %1932 = vmatprep.subr.mxu0 %v1736
    %1933 = vmatpush1.msra.mxu0 %v1735
    %1934 = vmatprep.subr.mxu0 %v1734
    %1935 = vmatpush1.msra.mxu0 %v1733
    %1936 = vmatprep.subr.mxu0 0.0
    %1937 = vmatpush2.msra.mxu0 0.0
    %1938 = vmatprep.subr.mxu0 0.0
    %1939 = vmatpush2.msra.mxu0 0.0
    %1940 = vmatprep.subr.mxu0 0.0
    %1941 = vmatpush2.msra.mxu0 0.0
    %1942 = vmatprep.subr.mxu0 0.0
    %1943 = vmatpush2.msra.mxu0 0.0
    %1944 = vmatprep.subr.mxu0 0.0
    %1945 = vmatpush2.msra.mxu0 0.0
    %1946 = vmatprep.subr.mxu0 0.0
    %1947 = vmatpush2.msra.mxu0 0.0
    %1948 = vmatprep.subr.mxu0 0.0
    %1949 = vmatpush2.msra.mxu0 0.0
    %1950 = vmatprep.subr.mxu0 0.0
    %1951 = vmatpush2.msra.mxu0 0.0
    %1952 = vmatprep.subr.mxu0 0.0
    %1953 = vmatpush2.msra.mxu0 0.0
    %1954 = vmatprep.subr.mxu0 0.0
    %1955 = vmatpush2.msra.mxu0 0.0
    %1956 = vmatprep.subr.mxu0 0.0
    %1957 = vmatpush2.msra.mxu0 0.0
    %1958 = vmatprep.subr.mxu0 0.0
    %1959 = vmatpush2.msra.mxu0 0.0
    %1960 = vmatprep.subr.mxu0 0.0
    %1961 = vmatpush2.msra.mxu0 0.0
    %1962 = vmatprep.subr.mxu0 0.0
    %1963 = vmatpush2.msra.mxu0 0.0
    %1964 = vmatprep.subr.mxu0 0.0
    %1965 = vmatpush2.msra.mxu0 0.0
    %1966 = vmatprep.subr.mxu0 0.0
    %1967 = vmatpush2.msra.mxu0 0.0
    %1968 = vmatprep.mubr.f32.mxu0 0.0
    %1969 = vmatmul.mubr.f32.gmra.mxu0 %v1893
    %v1970 = vpop.f32.mrf.mxu0
    %v1971 = vadd.f32 %v1878, %v1970
    %v1972 = vpop.f32.mrf.mxu0
    %v1973 = vadd.f32 %v1878, %v1972
    %1974 = vmatprep.mubr.f32.mxu0 0.0
    %1975 = vmatmul.mubr.f32.gmra.mxu0 %v1896
    %v1976 = vpop.f32.mrf.mxu0
    %v1977 = vadd.f32 %v1882, %v1976
    %v1978 = vpop.f32.mrf.mxu0
    %v1979 = vadd.f32 %v1882, %v1978
    %1980 = vmatprep.mubr.f32.mxu0 0.0
    %1981 = vmatmul.mubr.f32.gmra.mxu0 %v1899
    %v1982 = vpop.f32.mrf.mxu0
    %v1983 = vadd.f32 %v1886, %v1982
    %v1984 = vpop.f32.mrf.mxu0
    %v1985 = vadd.f32 %v1886, %v1984
    %1986 = vmatprep.mubr.f32.mxu0 0.0
    %1987 = vmatmul.mubr.f32.gmra.mxu0 %v1902
    %v1988 = vpop.f32.mrf.mxu0
    %v1989 = vadd.f32 %v1890, %v1988
    %v1990 = vpop.f32.mrf.mxu0
    %v1991 = vadd.f32 %v1890, %v1990
    %1992 = vdwg.mxu0
    %1993 = vmatprep.subr.mxu0 0.0
    %1994 = vmatpush1.msra.mxu0 0.0
    %1995 = vmatprep.subr.mxu0 0.0
    %1996 = vmatpush1.msra.mxu0 0.0
    %1997 = vmatprep.subr.mxu0 0.0
    %1998 = vmatpush1.msra.mxu0 0.0
    %1999 = vmatprep.subr.mxu0 0.0
    %2000 = vmatpush1.msra.mxu0 0.0
    %2001 = vmatprep.subr.mxu0 0.0
    %2002 = vmatpush1.msra.mxu0 0.0
    %2003 = vmatprep.subr.mxu0 0.0
    %2004 = vmatpush1.msra.mxu0 0.0
    %2005 = vmatprep.subr.mxu0 0.0
    %2006 = vmatpush1.msra.mxu0 0.0
    %2007 = vmatprep.subr.mxu0 0.0
    %2008 = vmatpush1.msra.mxu0 0.0
    %2009 = vmatprep.subr.mxu0 0.0
    %2010 = vmatpush1.msra.mxu0 0.0
    %2011 = vmatprep.subr.mxu0 0.0
    %2012 = vmatpush1.msra.mxu0 0.0
    %2013 = vmatprep.subr.mxu0 0.0
    %2014 = vmatpush1.msra.mxu0 0.0
    %2015 = vmatprep.subr.mxu0 0.0
    %2016 = vmatpush1.msra.mxu0 0.0
    %2017 = vmatprep.subr.mxu0 %v1871
    %2018 = vmatpush1.msra.mxu0 %v1870
    %2019 = vmatprep.subr.mxu0 %v1869
    %2020 = vmatpush1.msra.mxu0 %v1868
    %2021 = vmatprep.subr.mxu0 %v1867
    %2022 = vmatpush1.msra.mxu0 %v1866
    %2023 = vmatprep.subr.mxu0 %v1865
    %2024 = vmatpush1.msra.mxu0 %v1864
    %2025 = vmatprep.subr.mxu0 0.0
    %2026 = vmatpush2.msra.mxu0 0.0
    %2027 = vmatprep.subr.mxu0 0.0
    %2028 = vmatpush2.msra.mxu0 0.0
    %2029 = vmatprep.subr.mxu0 0.0
    %2030 = vmatpush2.msra.mxu0 0.0
    %2031 = vmatprep.subr.mxu0 0.0
    %2032 = vmatpush2.msra.mxu0 0.0
    %2033 = vmatprep.subr.mxu0 0.0
    %2034 = vmatpush2.msra.mxu0 0.0
    %2035 = vmatprep.subr.mxu0 0.0
    %2036 = vmatpush2.msra.mxu0 0.0
    %2037 = vmatprep.subr.mxu0 0.0
    %2038 = vmatpush2.msra.mxu0 0.0
    %2039 = vmatprep.subr.mxu0 0.0
    %2040 = vmatpush2.msra.mxu0 0.0
    %2041 = vmatprep.subr.mxu0 0.0
    %2042 = vmatpush2.msra.mxu0 0.0
    %2043 = vmatprep.subr.mxu0 0.0
    %2044 = vmatpush2.msra.mxu0 0.0
    %2045 = vmatprep.subr.mxu0 0.0
    %2046 = vmatpush2.msra.mxu0 0.0
    %2047 = vmatprep.subr.mxu0 0.0
    %2048 = vmatpush2.msra.mxu0 0.0
    %2049 = vmatprep.subr.mxu0 0.0
    %2050 = vmatpush2.msra.mxu0 0.0
    %2051 = vmatprep.subr.mxu0 0.0
    %2052 = vmatpush2.msra.mxu0 0.0
    %2053 = vmatprep.subr.mxu0 0.0
    %2054 = vmatpush2.msra.mxu0 0.0
    %2055 = vmatprep.subr.mxu0 0.0
    %2056 = vmatpush2.msra.mxu0 0.0
    %2057 = vmatprep.mubr.f32.mxu0 0.0
    %2058 = vmatmul.mubr.f32.gmra.mxu0 %v1893
    %v2059 = vpop.f32.mrf.mxu0
    %v2060 = vadd.f32 %v1878, %v2059
    %v2061 = vpop.f32.mrf.mxu0
    %v2062 = vadd.f32 %v1878, %v2061
    %2063 = vmatprep.mubr.f32.mxu0 0.0
    %2064 = vmatmul.mubr.f32.gmra.mxu0 %v1896
    %v2065 = vpop.f32.mrf.mxu0
    %v2066 = vadd.f32 %v1882, %v2065
    %v2067 = vpop.f32.mrf.mxu0
    %v2068 = vadd.f32 %v1882, %v2067
    %2069 = vmatprep.mubr.f32.mxu0 0.0
    %2070 = vmatmul.mubr.f32.gmra.mxu0 %v1899
    %v2071 = vpop.f32.mrf.mxu0
    %v2072 = vadd.f32 %v1886, %v2071
    %v2073 = vpop.f32.mrf.mxu0
    %v2074 = vadd.f32 %v1886, %v2073
    %2075 = vmatprep.mubr.f32.mxu0 0.0
    %2076 = vmatmul.mubr.f32.gmra.mxu0 %v1902
    %v2077 = vpop.f32.mrf.mxu0
    %v2078 = vadd.f32 %v1890, %v2077
    %v2079 = vpop.f32.mrf.mxu0
    %v2080 = vadd.f32 %v1890, %v2079
    %2081 = vdwg.mxu0
    %v2082 = vadd.f32 %v1971, %v42
    %v2083 = vadd.f32 %v1973, %v43
    %v2084 = vadd.f32 %v1977, %v44
    %v2085 = vadd.f32 %v1979, %v45
    %v2086 = vadd.f32 %v1983, %v46
    %v2087 = vadd.f32 %v1985, %v47
    %v2088 = vadd.f32 %v1989, %v48
    %v2089 = vadd.f32 %v1991, %v49
    %2090 = vst [vmem:[#allocation5] sm:$0xff] %v2082
    %2091 = vst [vmem:[#allocation5 + $0x8] sm:$0xff] %v2083
    %2092 = vst [vmem:[#allocation5 + $0x10] sm:$0xff] %v2084
    %2093 = vst [vmem:[#allocation5 + $0x18] sm:$0xff] %v2085
    %2094 = vst [vmem:[#allocation5 + $0x20] sm:$0xff] %v2086
    %2095 = vst [vmem:[#allocation5 + $0x28] sm:$0xff] %v2087
    %2096 = vst [vmem:[#allocation5 + $0x30] sm:$0xff] %v2088
    %2097 = vst [vmem:[#allocation5 + $0x38] sm:$0xff] %v2089
    %v2098 = vld [vmem:[%s50] sm:$0xff]
    %v2099 = vld [vmem:[%s50 + $0x8] sm:$0xff]
    %v2100 = vld [vmem:[%s50 + $0x10] sm:$0xff]
    %v2101 = vld [vmem:[%s50 + $0x18] sm:$0xff]
    %v2102 = vld [vmem:[%s50 + $0x20] sm:$0xff]
    %v2103 = vld [vmem:[%s50 + $0x28] sm:$0xff]
    %v2104 = vld [vmem:[%s50 + $0x30] sm:$0xff]
    %v2105 = vld [vmem:[%s50 + $0x38] sm:$0xff]
    %v2106 = vadd.f32 %v2060, %v2098
    %v2107 = vadd.f32 %v2062, %v2099
    %v2108 = vadd.f32 %v2066, %v2100
    %v2109 = vadd.f32 %v2068, %v2101
    %v2110 = vadd.f32 %v2072, %v2102
    %v2111 = vadd.f32 %v2074, %v2103
    %v2112 = vadd.f32 %v2078, %v2104
    %v2113 = vadd.f32 %v2080, %v2105
    %s2114 = scalar_lea.vmem [#allocation5], 64
    %2115 = vst [vmem:[%s2114] sm:$0xff] %v2106
    %2116 = vst [vmem:[%s2114 + $0x8] sm:$0xff] %v2107
    %2117 = vst [vmem:[%s2114 + $0x10] sm:$0xff] %v2108
    %2118 = vst [vmem:[%s2114 + $0x18] sm:$0xff] %v2109
    %2119 = vst [vmem:[%s2114 + $0x20] sm:$0xff] %v2110
    %2120 = vst [vmem:[%s2114 + $0x28] sm:$0xff] %v2111
    %2121 = vst [vmem:[%s2114 + $0x30] sm:$0xff] %v2112
    %2122 = vst [vmem:[%s2114 + $0x38] sm:$0xff] %v2113
    // Predicated region
    $region30: #{tpu_custom_call.1} parent=1 // pred_check
      _
    $region31: #{tpu_custom_call.1} parent=1 // pred_check_branch
      %2124 = sbr.rel (0) target = $region33
    $region32: #{tpu_custom_call.1} parent=1 // pred_region
      %s2126 = ssub.s32 2048, 2048
      %2127 = vsyncadd [#allocation4], %s2126
      %s2128 = sshll.u32 [#allocation5], 4
      %s2129 = int_to_ptr.vmem [resolvable:$true] %s2128
      %2134 = dma.vmem_to_hbm [thread:$0]  %s2129, 2048, %s6, [#allocation4], 256, 256, 16
    $region33: #{tpu_custom_call.1} parent=1 // pred_fallthru
      _
    // Predicated region
    $region34: #{tpu_custom_call.1} parent=1 // pred_check
      _
    $region35: #{tpu_custom_call.1} parent=1 // pred_check_branch
      %2136 = sbr.rel (0) target = $region37
    $region36: #{tpu_custom_call.1} parent=1 // pred_region
      %2137 = dma.done [#allocation4], 2048
    $region37: #{tpu_custom_call.1} parent=1 // pred_fallthru
      _
    %2138 = vsyncpa [#allocation3], 1
    %2139 = vsyncpa [#allocation4], 1

</llo_original>
